<compile_context>
chip_gen: v5e
topology: v5e:2x2
jax: 0.10.0
libtpu: 0.0.40
codegen_flags: <defaults>
</compile_context>

<pallas_src>
import jax
import jax.numpy as jnp
from jax.experimental import pallas as pl
from jax.experimental.pallas import tpu as pltpu


def rbfnn3d_kernel(xt_ref, cpack_ref, w1a_t_ref, scb_ref, w2b_ref, out_ref):
    xt = xt_ref[...]                       # [3, TN] f32 (batch on lanes)
    x0 = xt[0:1, :]                        # [1, TN]
    x1 = xt[1:2, :]                        # [1, TN]
    theta = xt[2:3, :]                     # [1, TN]

    c0 = cpack_ref[:, 0:1]                 # [C, 1]
    c1 = cpack_ref[:, 1:2]                 # [C, 1]
    neg_inv_2s2 = cpack_ref[:, 2:3]        # [C, 1]  = -1 / (2*sigma^2), host-precomputed

    # squared distances to centers: [C, TN]
    d0 = x0 - c0
    d1 = x1 - c1
    d2 = d0 * d0 + d1 * d1
    rbf = jnp.exp(d2 * neg_inv_2s2)        # [C, TN]  (single EUP exp, no divide)

    s = jnp.sin(theta)                     # [1, TN]
    c = jnp.cos(theta)                     # [1, TN]

    w1s = scb_ref[:, 0:1]                  # [H, 1]  (sin column of W1)
    w1c = scb_ref[:, 1:2]                  # [H, 1]  (cos column of W1)
    b1 = scb_ref[:, 2:3]                   # [H, 1]

    # first linear layer (concat folded in); MXU output lane dim = TN
    h = jnp.dot(w1a_t_ref[...], rbf, preferred_element_type=jnp.float32)  # [H, TN]
    h = h + w1s * s + w1c * c + b1
    h = jax.nn.sigmoid(h)

    H = w1a_t_ref.shape[0]
    w2t = w2b_ref[:, :H]                   # [O, H]
    b2 = w2b_ref[:, H:H + 1]               # [O, 1]

    out = jnp.dot(w2t, h, preferred_element_type=jnp.float32) + b2        # [O, TN]
    out_ref[...] = out.astype(out_ref.dtype)   # lane-dense (O, TN) store


def rbfnn3d_forward(x, params, *, tile_n=512):
    N, D = x.shape
    assert D == 3, "this kernel implements the input_dim == 3 path"
    C = params["centers"].shape[0]
    H = params["w1"].shape[1]
    O = params["w2"].shape[1]

    # pad batch to a multiple of tile_n (padded rows are sliced off below)
    n_pad = (-N) % tile_n
    Np = N + n_pad
    x_t = x.T                                                 # [3, N]
    if n_pad:
        x_t = jnp.pad(x_t, ((0, 0), (0, n_pad)))

    # host-side parameter packing
    sig = jnp.exp(params["log_sigmas"])
    neg_inv_2s2 = (-1.0 / (2.0 * sig * sig)).reshape(C, 1)
    cpack = jnp.concatenate([params["centers"], neg_inv_2s2], axis=1)     # [C, 3]
    w1a_t = params["w1"][:C, :].T                                         # [H, C]
    scb = jnp.stack([params["w1"][C], params["w1"][C + 1],
                     params["b1"]], axis=1)                               # [H, 3]
    w2b = jnp.concatenate([params["w2"].T,
                           params["b2"].reshape(O, 1)], axis=1)           # [O, H+1]

    rep = lambda blk: pl.BlockSpec(blk, lambda i: (0, 0))  # replicated per tile
    # NOTE: replicated weights could additionally use pipeline_mode=pl.Buffered(1);
    # skipped here — negligible VMEM and keeps lowering on the well-trodden path.

    out_t = pl.pallas_call(
        rbfnn3d_kernel,
        out_shape=jax.ShapeDtypeStruct((O, Np), jnp.float32),
        grid_spec=pltpu.PrefetchScalarGridSpec(
            num_scalar_prefetch=0,
            grid=(Np // tile_n,),
            in_specs=[
                pl.BlockSpec((3, tile_n), lambda i: (0, i)),   # x^T tile
                rep((C, 3)),                                   # [centers | -1/(2s^2)]
                rep((H, C)),                                   # W1[:C]^T
                rep((H, 3)),                                   # [w1_sin | w1_cos | b1]
                rep((O, H + 1)),                               # [W2^T | b2]
            ],
            out_specs=pl.BlockSpec((O, tile_n), lambda i: (0, i)),
        ),
        compiler_params=pltpu.CompilerParams(
            dimension_semantics=("parallel",)),
    )(x_t, cpack, w1a_t, scb, w2b)

    return out_t[:, :N].T                                      # [N, O]


def init_params(key, input_dim=3, num_centers=32, hidden=64, output_dim=1):
    """Deterministic synthetic init matching the PyTorch module's shapes."""
    rbf_in = input_dim if input_dim < 3 else input_dim - 1       # = 2
    lin_in = num_centers + (2 if input_dim == 3 else 0)          # = C + 2
    k1, k2, k3, k4, k5 = jax.random.split(key, 5)
    b1_scale = 1.0 / jnp.sqrt(lin_in)
    b2_scale = 1.0 / jnp.sqrt(hidden)
    return {
        "centers": jax.random.uniform(k1, (num_centers, rbf_in), jnp.float32),
        "log_sigmas": jnp.zeros((num_centers,), jnp.float32),
        "w1": jax.random.uniform(k2, (lin_in, hidden), jnp.float32,
                                 -b1_scale, b1_scale),
        "b1": jax.random.uniform(k3, (hidden,), jnp.float32, -b1_scale, b1_scale),
        "w2": jax.random.uniform(k4, (hidden, output_dim), jnp.float32,
                                 -b2_scale, b2_scale),
        "b2": jax.random.uniform(k5, (output_dim,), jnp.float32,
                                 -b2_scale, b2_scale),
    }


def reference_forward(x, p):
    """Pure-JAX reference mirroring the PyTorch forward exactly."""
    xy, theta = x[..., :-1], x[..., -1:]
    diff = xy[:, None, :] - p["centers"][None, :, :]           # [N, C, 2]
    d2 = jnp.sum(diff ** 2, axis=-1)                           # [N, C]
    sig = jnp.exp(p["log_sigmas"])[None, :]
    rbf = jnp.exp(-d2 / (2.0 * sig ** 2))
    feat = jnp.concatenate([rbf, jnp.sin(theta), jnp.cos(theta)], axis=-1)
    h = jax.nn.sigmoid(feat @ p["w1"] + p["b1"])
    return h @ p["w2"] + p["b2"]


if __name__ == "__main__":
    INPUT_DIM, NUM_CENTERS = 3, 32

    key = jax.random.PRNGKey(0)
    kx, kx2, kp = jax.random.split(key, 3)
    params = init_params(kp, input_dim=INPUT_DIM, num_centers=NUM_CENTERS)

    # aligned batch: grid of 4 parallel tiles (keeps >=2 steps for v7x megacore)
    N = 2048
    x = jax.random.uniform(kx, (N, INPUT_DIM), jnp.float32, -1.0, 1.0)
    out = jax.block_until_ready(rbfnn3d_forward(x, params, tile_n=512))
    ref = reference_forward(x, params)
    assert out.shape == ref.shape == (N, 1)
    assert jnp.allclose(out, ref, atol=1e-5, rtol=1e-5), "mismatch vs reference"

    # ragged batch: exercises the zero-padding / tail-slice path
    N2 = 777
    x2 = jax.random.uniform(kx2, (N2, INPUT_DIM), jnp.float32, -1.0, 1.0)
    out2 = jax.block_until_ready(rbfnn3d_forward(x2, params, tile_n=512))
    ref2 = reference_forward(x2, params)
    assert out2.shape == ref2.shape == (N2, 1)
    assert jnp.allclose(out2, ref2, atol=1e-5, rtol=1e-5), "mismatch (ragged N)"

    print("KERNEL_OK")
</pallas_src>

<mosaic_0001>
module attributes {stable_mosaic.version = 11 : i64} {
  func.func @rbfnn3d_kernel(%arg0: i32, %arg1: memref<3x512xf32, #tpu.memory_space<vmem>>, %arg2: memref<32x3xf32, #tpu.memory_space<vmem>>, %arg3: memref<64x32xf32, #tpu.memory_space<vmem>>, %arg4: memref<64x3xf32, #tpu.memory_space<vmem>>, %arg5: memref<1x65xf32, #tpu.memory_space<vmem>>, %arg6: memref<1x512xf32, #tpu.memory_space<vmem>>) attributes {dimension_semantics = [#tpu.dimension_semantics<parallel>], iteration_bounds = array<i64: 4>, scalar_prefetch = 0 : i64, scratch_operands = 0 : i64, tpu.core_type = #tpu.core_type<tc>, window_params = [{transform_indices = @transform_0, window_bounds = array<i64: 3, 512>}, {pipeline_mode = #tpu.pipeline_mode<synchronous>, transform_indices = @transform_1, window_bounds = array<i64: 32, 3>}, {pipeline_mode = #tpu.pipeline_mode<synchronous>, transform_indices = @transform_2, window_bounds = array<i64: 64, 32>}, {pipeline_mode = #tpu.pipeline_mode<synchronous>, transform_indices = @transform_3, window_bounds = array<i64: 64, 3>}, {pipeline_mode = #tpu.pipeline_mode<synchronous>, transform_indices = @transform_4, window_bounds = array<i64: 1, 65>}, {transform_indices = @transform_5, window_bounds = array<i64: 1, 512>}]} {
    %c0 = arith.constant 0 : index
    %c0_0 = arith.constant 0 : index
    %0 = vector.load %arg1[%c0, %c0_0] : memref<3x512xf32, #tpu.memory_space<vmem>>, vector<3x512xf32>
    %1 = vector.extract_strided_slice %0 {offsets = [0, 0], sizes = [1, 512], strides = [1, 1]} : vector<3x512xf32> to vector<1x512xf32>
    %2 = vector.extract_strided_slice %0 {offsets = [1, 0], sizes = [1, 512], strides = [1, 1]} : vector<3x512xf32> to vector<1x512xf32>
    %3 = vector.extract_strided_slice %0 {offsets = [2, 0], sizes = [1, 512], strides = [1, 1]} : vector<3x512xf32> to vector<1x512xf32>
    %c0_1 = arith.constant 0 : index
    %c0_2 = arith.constant 0 : index
    %4 = vector.load %arg2[%c0_1, %c0_2] : memref<32x3xf32, #tpu.memory_space<vmem>>, vector<32x1xf32>
    %c0_3 = arith.constant 0 : index
    %c1 = arith.constant 1 : index
    %5 = vector.load %arg2[%c0_3, %c1] : memref<32x3xf32, #tpu.memory_space<vmem>>, vector<32x1xf32>
    %c0_4 = arith.constant 0 : index
    %c2 = arith.constant 2 : index
    %6 = vector.load %arg2[%c0_4, %c2] : memref<32x3xf32, #tpu.memory_space<vmem>>, vector<32x1xf32>
    %7 = vector.broadcast %1 : vector<1x512xf32> to vector<32x512xf32>
    %8 = vector.broadcast %4 : vector<32x1xf32> to vector<32x512xf32>
    %9 = arith.subf %7, %8 : vector<32x512xf32>
    %10 = vector.broadcast %2 : vector<1x512xf32> to vector<32x512xf32>
    %11 = vector.broadcast %5 : vector<32x1xf32> to vector<32x512xf32>
    %12 = arith.subf %10, %11 : vector<32x512xf32>
    %13 = arith.mulf %9, %9 : vector<32x512xf32>
    %14 = arith.mulf %12, %12 : vector<32x512xf32>
    %15 = arith.addf %13, %14 : vector<32x512xf32>
    %16 = vector.broadcast %6 : vector<32x1xf32> to vector<32x512xf32>
    %17 = arith.mulf %15, %16 : vector<32x512xf32>
    %18 = math.exp %17 : vector<32x512xf32>
    %19 = math.sin %3 : vector<1x512xf32>
    %20 = math.cos %3 : vector<1x512xf32>
    %c0_5 = arith.constant 0 : index
    %c0_6 = arith.constant 0 : index
    %21 = vector.load %arg4[%c0_5, %c0_6] : memref<64x3xf32, #tpu.memory_space<vmem>>, vector<64x1xf32>
    %c0_7 = arith.constant 0 : index
    %c1_8 = arith.constant 1 : index
    %22 = vector.load %arg4[%c0_7, %c1_8] : memref<64x3xf32, #tpu.memory_space<vmem>>, vector<64x1xf32>
    %c0_9 = arith.constant 0 : index
    %c2_10 = arith.constant 2 : index
    %23 = vector.load %arg4[%c0_9, %c2_10] : memref<64x3xf32, #tpu.memory_space<vmem>>, vector<64x1xf32>
    %c0_11 = arith.constant 0 : index
    %c0_12 = arith.constant 0 : index
    %24 = vector.load %arg3[%c0_11, %c0_12] : memref<64x32xf32, #tpu.memory_space<vmem>>, vector<64x32xf32>
    %cst = arith.constant dense<0.000000e+00> : vector<64x512xf32>
    %25 = tpu.matmul %24, %18, %cst {dimension_numbers = #tpu.dot_dimension_numbers<[1], [0], [0], [1], [0, 0, 1, 1], [], []>} : vector<64x32xf32>, vector<32x512xf32>, vector<64x512xf32> -> vector<64x512xf32>
    %26 = vector.broadcast %21 : vector<64x1xf32> to vector<64x512xf32>
    %27 = vector.broadcast %19 : vector<1x512xf32> to vector<64x512xf32>
    %28 = arith.mulf %26, %27 : vector<64x512xf32>
    %29 = arith.addf %25, %28 : vector<64x512xf32>
    %30 = vector.broadcast %22 : vector<64x1xf32> to vector<64x512xf32>
    %31 = vector.broadcast %20 : vector<1x512xf32> to vector<64x512xf32>
    %32 = arith.mulf %30, %31 : vector<64x512xf32>
    %33 = arith.addf %29, %32 : vector<64x512xf32>
    %34 = vector.broadcast %23 : vector<64x1xf32> to vector<64x512xf32>
    %35 = arith.addf %33, %34 : vector<64x512xf32>
    %36 = arith.negf %35 : vector<64x512xf32>
    %37 = math.exp %36 : vector<64x512xf32>
    %cst_13 = arith.constant 1.000000e+00 : f32
    %38 = vector.broadcast %cst_13 : f32 to vector<64x512xf32>
    %39 = arith.addf %38, %37 : vector<64x512xf32>
    %40 = arith.divf %38, %39 : vector<64x512xf32>
    %c0_14 = arith.constant 0 : index
    %c0_15 = arith.constant 0 : index
    %41 = vector.load %arg5[%c0_14, %c0_15] : memref<1x65xf32, #tpu.memory_space<vmem>>, vector<1x64xf32>
    %c0_16 = arith.constant 0 : index
    %c64 = arith.constant 64 : index
    %42 = vector.load %arg5[%c0_16, %c64] : memref<1x65xf32, #tpu.memory_space<vmem>>, vector<1x1xf32>
    %cst_17 = arith.constant dense<0.000000e+00> : vector<1x512xf32>
    %43 = tpu.matmul %41, %40, %cst_17 {dimension_numbers = #tpu.dot_dimension_numbers<[1], [0], [0], [1], [0, 0, 1, 1], [], []>} : vector<1x64xf32>, vector<64x512xf32>, vector<1x512xf32> -> vector<1x512xf32>
    %44 = vector.broadcast %42 : vector<1x1xf32> to vector<1x512xf32>
    %45 = arith.addf %43, %44 : vector<1x512xf32>
    %c0_18 = arith.constant 0 : index
    %c0_19 = arith.constant 0 : index
    %46 = vector.load %arg6[%c0_18, %c0_19] : memref<1x512xf32, #tpu.memory_space<vmem>>, vector<1x512xf32>
    tpu.vector_store %arg6[%c0_18, %c0_19], %45 {strides = array<i32>} : memref<1x512xf32, #tpu.memory_space<vmem>>, vector<1x512xf32>,
    return
  }
  func.func @transform_0(%arg0: i32) -> (i32, i32) {
    %c0_i32 = arith.constant 0 : i32
    %c0_i32_0 = arith.constant 0 : i32
    return %c0_i32, %arg0 : i32, i32
  }
  func.func @transform_1(%arg0: i32) -> (i32, i32) {
    %c0_i32 = arith.constant 0 : i32
    %c0_i32_0 = arith.constant 0 : i32
    %c0_i32_1 = arith.constant 0 : i32
    return %c0_i32, %c0_i32_0 : i32, i32
  }
  func.func @transform_2(%arg0: i32) -> (i32, i32) {
    %c0_i32 = arith.constant 0 : i32
    %c0_i32_0 = arith.constant 0 : i32
    %c0_i32_1 = arith.constant 0 : i32
    return %c0_i32, %c0_i32_0 : i32, i32
  }
  func.func @transform_3(%arg0: i32) -> (i32, i32) {
    %c0_i32 = arith.constant 0 : i32
    %c0_i32_0 = arith.constant 0 : i32
    %c0_i32_1 = arith.constant 0 : i32
    return %c0_i32, %c0_i32_0 : i32, i32
  }
  func.func @transform_4(%arg0: i32) -> (i32, i32) {
    %c0_i32 = arith.constant 0 : i32
    %c0_i32_0 = arith.constant 0 : i32
    %c0_i32_1 = arith.constant 0 : i32
    return %c0_i32, %c0_i32_0 : i32, i32
  }
  func.func @transform_5(%arg0: i32) -> (i32, i32) {
    %c0_i32 = arith.constant 0 : i32
    %c0_i32_0 = arith.constant 0 : i32
    return %c0_i32, %arg0 : i32, i32
  }
}

</mosaic_0001>

<llo_original>
// kernel: tpu_custom_call.1
$region0: #{tpu_custom_call.1}
  #allocation0 [shape = 'u32[]', space=smem, size = 0x4, offset = 0x4, fixed_abs, tag = 'smem constant byte address 0x4 - core index']
  #allocation1 [shape = 'u32[72,128]{1,0:T(1,128)}', space=vmem, size = 0x9000, scoped, tag = 'internal scratch']
  %s0 = inlined_call_operand.vmem [shape: f32[3,2048], index: 0, kind: input, shape index: {}]
  %s1 = inlined_call_operand.vmem [shape: f32[32,3], index: 1, kind: input, shape index: {}]
  %s2 = inlined_call_operand.vmem [shape: f32[64,32], index: 2, kind: input, shape index: {}]
  %s3 = inlined_call_operand.vmem [shape: f32[64,3], index: 3, kind: input, shape index: {}]
  %s4 = inlined_call_operand.vmem [shape: f32[1,65], index: 4, kind: input, shape index: {}]
  %s5 = inlined_call_operand.hbm [shape: f32[1,2048], index: 5, kind: output, shape index: {}]
  %s6 = sld [smem:[#allocation0]]
  $region53: #{tpu_custom_call.1} parent=0
    _
  %s8 = ssub.s32 1, %s6
  %s9 = scalar_select 0, %s8, %s6
  $region1: #{tpu_custom_call.1} parent=0
    #allocation2 [shape = 'u8[4096]{0}', space=vmem, size = 0x1000, scoped, tag = 'output window, operand 0']
    #allocation3 [shape = 's32[2]{0}', space=sflag, size = 0x8, scoped, tag = 'scoped memory for tpu_custom_call.1']
    %10 = vsyncpa [#allocation3], 0
    %s11 = scalar_lea.sflag [#allocation3], 1
    %12 = vsyncpa %s11, 0
    loop: start=0, step=1, limit=6
    $region2: #{tpu_custom_call.1} parent=1 // loop_pre_header
      _
    $region3: #{tpu_custom_call.1} parent=1 // loop_header
      %s14 = sphi 0, %s18
      %p15 = scmp.ge.s32.totalorder %s14, 6
      %s24 = sphi 0, %s26
      %s27 = sphi 0, %s24
      %s28 = sphi 0, %s27
      %s44 = sphi 0, %s28
      %s48 = sphi 0, %s48
      %s50 = sphi 0, %s48
      %s51 = sphi 0, %s50
      %s65 = sphi 0, %s51
      %s69 = sphi 0, %s69
      %s71 = sphi 0, %s69
      %s72 = sphi 0, %s71
      %s86 = sphi 0, %s72
      %s90 = sphi 0, %s90
      %s92 = sphi 0, %s90
      %s93 = sphi 0, %s92
      %s107 = sphi 0, %s93
      %s111 = sphi 0, %s111
      %s113 = sphi 0, %s111
      %s114 = sphi 0, %s113
      %s128 = sphi 0, %s114
      %s134 = sphi 0, %s136
      %s137 = sphi 0, %s134
      %s138 = sphi 0, %s137
      %s154 = sphi 0, %s138
    $region4: #{tpu_custom_call.1} parent=1 // loop_header_branch
      %17 = sbr.rel (%p15) target = $region8
    $region5: #{tpu_custom_call.1} parent=1 // loop_body
      %s19 = ssub.s32 %s14, 1
      %s20 = ssub.s32 %s14, 2
      %s21 = sadd.s32 %s14, 1
      %s22 = ssub.s32 %s14, %s21
      %p23 = scmp.eq.s32.totalorder %s22, 0
      %s25 = sadd.s32 %s24, 1
      %s26 = scalar_select %p23, %s24, %s25
      %p29 = pneg %p23
      %p30 = scmp.eq.s32.totalorder %s14, 3
      %p31 = por %p29, %p30
      %p32 = scmp.ne.s32.totalorder %s24, %s27
      %p33 = scmp.eq.s32.totalorder %s14, 0
      %p34 = por %p32, %p33
      %p35 = scmp.ne.s32.totalorder %s24, %s27
      %p36 = scmp.eq.s32.totalorder %s19, 3
      %p37 = por %p35, %p36
      %p38 = scmp.ne.s32.totalorder %s27, %s28
      %p39 = scmp.eq.s32.totalorder %s19, 0
      %p40 = por %p38, %p39
      %p41 = scmp.ne.s32.totalorder %s27, %s28
      %p42 = scmp.eq.s32.totalorder %s20, 3
      %p43 = por %p41, %p42
      %p45 = scmp.ne.s32.totalorder %s28, %s44
      %p46 = scmp.eq.s32.totalorder %s20, 0
      %p47 = por %p45, %p46
      %s49 = sadd.s32 %s48, 1
      %p52 = scmp.eq.s32.totalorder %s14, 3
      %p53 = scmp.ne.s32.totalorder %s48, %s50
      %p54 = scmp.eq.s32.totalorder %s14, 0
      %p55 = por %p53, %p54
      %p56 = scmp.ne.s32.totalorder %s48, %s50
      %p57 = scmp.eq.s32.totalorder %s19, 3
      %p58 = por %p56, %p57
      %p59 = scmp.ne.s32.totalorder %s50, %s51
      %p60 = scmp.eq.s32.totalorder %s19, 0
      %p61 = por %p59, %p60
      %p62 = scmp.ne.s32.totalorder %s50, %s51
      %p63 = scmp.eq.s32.totalorder %s20, 3
      %p64 = por %p62, %p63
      %p66 = scmp.ne.s32.totalorder %s51, %s65
      %p67 = scmp.eq.s32.totalorder %s20, 0
      %p68 = por %p66, %p67
      %s70 = sadd.s32 %s69, 1
      %p73 = scmp.eq.s32.totalorder %s14, 3
      %p74 = scmp.ne.s32.totalorder %s69, %s71
      %p75 = scmp.eq.s32.totalorder %s14, 0
      %p76 = por %p74, %p75
      %p77 = scmp.ne.s32.totalorder %s69, %s71
      %p78 = scmp.eq.s32.totalorder %s19, 3
      %p79 = por %p77, %p78
      %p80 = scmp.ne.s32.totalorder %s71, %s72
      %p81 = scmp.eq.s32.totalorder %s19, 0
      %p82 = por %p80, %p81
      %p83 = scmp.ne.s32.totalorder %s71, %s72
      %p84 = scmp.eq.s32.totalorder %s20, 3
      %p85 = por %p83, %p84
      %p87 = scmp.ne.s32.totalorder %s72, %s86
      %p88 = scmp.eq.s32.totalorder %s20, 0
      %p89 = por %p87, %p88
      %s91 = sadd.s32 %s90, 1
      %p94 = scmp.eq.s32.totalorder %s14, 3
      %p95 = scmp.ne.s32.totalorder %s90, %s92
      %p96 = scmp.eq.s32.totalorder %s14, 0
      %p97 = por %p95, %p96
      %p98 = scmp.ne.s32.totalorder %s90, %s92
      %p99 = scmp.eq.s32.totalorder %s19, 3
      %p100 = por %p98, %p99
      %p101 = scmp.ne.s32.totalorder %s92, %s93
      %p102 = scmp.eq.s32.totalorder %s19, 0
      %p103 = por %p101, %p102
      %p104 = scmp.ne.s32.totalorder %s92, %s93
      %p105 = scmp.eq.s32.totalorder %s20, 3
      %p106 = por %p104, %p105
      %p108 = scmp.ne.s32.totalorder %s93, %s107
      %p109 = scmp.eq.s32.totalorder %s20, 0
      %p110 = por %p108, %p109
      %s112 = sadd.s32 %s111, 1
      %p115 = scmp.eq.s32.totalorder %s14, 3
      %p116 = scmp.ne.s32.totalorder %s111, %s113
      %p117 = scmp.eq.s32.totalorder %s14, 0
      %p118 = por %p116, %p117
      %p119 = scmp.ne.s32.totalorder %s111, %s113
      %p120 = scmp.eq.s32.totalorder %s19, 3
      %p121 = por %p119, %p120
      %p122 = scmp.ne.s32.totalorder %s113, %s114
      %p123 = scmp.eq.s32.totalorder %s19, 0
      %p124 = por %p122, %p123
      %p125 = scmp.ne.s32.totalorder %s113, %s114
      %p126 = scmp.eq.s32.totalorder %s20, 3
      %p127 = por %p125, %p126
      %p129 = scmp.ne.s32.totalorder %s114, %s128
      %p130 = scmp.eq.s32.totalorder %s20, 0
      %p131 = por %p129, %p130
      %s132 = ssub.s32 %s14, %s21
      %p133 = scmp.eq.s32.totalorder %s132, 0
      %s135 = sadd.s32 %s134, 1
      %s136 = scalar_select %p133, %s134, %s135
      %p139 = pneg %p133
      %p140 = scmp.eq.s32.totalorder %s14, 3
      %p141 = por %p139, %p140
      %p142 = scmp.ne.s32.totalorder %s134, %s137
      %p143 = scmp.eq.s32.totalorder %s14, 0
      %p144 = por %p142, %p143
      %p145 = scmp.ne.s32.totalorder %s134, %s137
      %p146 = scmp.eq.s32.totalorder %s19, 3
      %p147 = por %p145, %p146
      %p148 = scmp.ne.s32.totalorder %s137, %s138
      %p149 = scmp.eq.s32.totalorder %s19, 0
      %p150 = por %p148, %p149
      %p151 = scmp.ne.s32.totalorder %s137, %s138
      %p152 = scmp.eq.s32.totalorder %s20, 3
      %p153 = por %p151, %p152
      %p155 = scmp.ne.s32.totalorder %s138, %s154
      %p156 = scmp.eq.s32.totalorder %s20, 0
      %p157 = por %p155, %p156
      %p158 = scmp.le.s32.totalorder 1, %s14
      %p159 = scmp.lt.s32.totalorder %s14, 5
      %p160 = pnand %p158, %p159
      %p161 = pneg %p160
      // Predicated region
      $region9: #{tpu_custom_call.1} parent=5 // pred_check
        _
      $region10: #{tpu_custom_call.1} parent=5 // pred_check_branch
        %163 = sbr.rel (%p160) target = $region12
      $region11: #{tpu_custom_call.1} parent=5 // pred_region
        %s164 = ssub.s32 %s14, 1
        // Predicated region
        $region13: #{tpu_custom_call.1} parent=11 // pred_check
          %p165 = pneg %p61
        $region14: #{tpu_custom_call.1} parent=11 // pred_check_branch
          %167 = sbr.rel (%p165) target = $region16
        $region15: #{tpu_custom_call.1} parent=11 // pred_region
          _
        $region16: #{tpu_custom_call.1} parent=11 // pred_fallthru
          _
        // Predicated region
        $region17: #{tpu_custom_call.1} parent=11 // pred_check
          %p168 = pneg %p82
        $region18: #{tpu_custom_call.1} parent=11 // pred_check_branch
          %170 = sbr.rel (%p168) target = $region20
        $region19: #{tpu_custom_call.1} parent=11 // pred_region
          _
        $region20: #{tpu_custom_call.1} parent=11 // pred_fallthru
          _
        // Predicated region
        $region21: #{tpu_custom_call.1} parent=11 // pred_check
          %p171 = pneg %p103
        $region22: #{tpu_custom_call.1} parent=11 // pred_check_branch
          %173 = sbr.rel (%p171) target = $region24
        $region23: #{tpu_custom_call.1} parent=11 // pred_region
          _
        $region24: #{tpu_custom_call.1} parent=11 // pred_fallthru
          _
        // Predicated region
        $region25: #{tpu_custom_call.1} parent=11 // pred_check
          %p174 = pneg %p124
        $region26: #{tpu_custom_call.1} parent=11 // pred_check_branch
          %176 = sbr.rel (%p174) target = $region28
        $region27: #{tpu_custom_call.1} parent=11 // pred_region
          _
        $region28: #{tpu_custom_call.1} parent=11 // pred_fallthru
          _
      $region12: #{tpu_custom_call.1} parent=5 // pred_fallthru
        _
      %p177 = scmp.lt.s32.totalorder %s14, 4
      // Predicated region
      $region29: #{tpu_custom_call.1} parent=5 // pred_check
        %p178 = pneg %p177
      $region30: #{tpu_custom_call.1} parent=5 // pred_check_branch
        %180 = sbr.rel (%p178) target = $region32
      $region31: #{tpu_custom_call.1} parent=5 // pred_region
        // Predicated region
        $region33: #{tpu_custom_call.1} parent=31 // pred_check
          %p181 = pneg %p34
        $region34: #{tpu_custom_call.1} parent=31 // pred_check_branch
          %183 = sbr.rel (%p181) target = $region36
        $region35: #{tpu_custom_call.1} parent=31 // pred_region
          %s184 = smul.u32 4, %s14
          %p185 = scmp.lt.s32.totalorder %s184, 15
          %s186 = scalar_select %p185, %s184, 15
          %s187 = smul.addr %s186, 4
          %s188 = scalar_lea.vmem %s0, %s187
          %s189 = smul.u32 4, %s14
        $region36: #{tpu_custom_call.1} parent=31 // pred_fallthru
          _
      $region32: #{tpu_custom_call.1} parent=5 // pred_fallthru
        _
      %p190 = scmp.le.s32.totalorder 1, %s14
      %p191 = scmp.lt.s32.totalorder %s14, 5
      %p192 = pnand %p190, %p191
      %p193 = pneg %p192
      // Predicated region
      $region37: #{tpu_custom_call.1} parent=5 // pred_check
        _
      $region38: #{tpu_custom_call.1} parent=5 // pred_check_branch
        %195 = sbr.rel (%p192) target = $region40
      $region39: #{tpu_custom_call.1} parent=5 // pred_region
        %s196 = ssub.s32 %s14, 1
        %s197 = smul.u32 4, %s19
        %p198 = scmp.lt.s32.totalorder %s197, 15
        %s199 = scalar_select %p198, %s197, 15
        %s200 = smul.addr %s199, 4
        %s201 = scalar_lea.vmem %s0, %s200
        %p202 = pneg %p40
        %p203 = pneg %p37
        %p204 = pneg %p61
        %p205 = pneg %p58
        %p206 = pneg %p82
        %p207 = pneg %p79
        %p208 = pneg %p103
        %p209 = pneg %p100
        %p210 = pneg %p124
        %p211 = pneg %p121
        %p212 = pneg %p150
        %p213 = pneg %p147
        %s214 = sand.u32 %s137, 1
        %s215 = scalar_lea.sflag [#allocation3], %s214
        %s216 = sand.u32 %s137, 1
        %s217 = smul.addr %s216, 4
        %s218 = scalar_lea.vmem [#allocation2], %s217
        %s219 = smul.u32 4, %s19
        %p220 = scmp.lt.s32.totalorder %s219, 15
        %s221 = scalar_select %p220, %s219, 15
        %s222 = smul.addr %s221, 4
        %s223 = scalar_lea.vmem %s0, %s222
        %s224 = smul.u32 4, %s19
        %s225 = smul.u32 4, %s19
        %v226 = vld [vmem:[%s223] sm:$0x77]
        %v227 = vld [vmem:[%s223 + $0x8] sm:$0x77]
        %v228 = vld [vmem:[%s1] sm:$0xff]
        %v229 = vld [vmem:[%s1 + $0x8] sm:$0xff]
        %v230 = vld [vmem:[%s1 + $0x10] sm:$0xff]
        %v231 = vld [vmem:[%s1 + $0x18] sm:$0xff]
        %v234 = vperm.slane %v226, 0
        %v235 = vperm.slane %v226, 4
        %v236 = vperm.slane %v227, 0
        %v237 = vperm.slane %v227, 4
        %v242 = vperm.slane %v234, 0
        %v243 = vperm.slane %v235, 0
        %v244 = vperm.slane %v236, 0
        %v245 = vperm.slane %v237, 0
        %247 = vset.pattern.permute.xlu0 0
        %248 = vperm.xlu0 %247, %v228
        %v249 = vpop.permute.xlu0 %248
        %252 = vset.pattern.permute.xlu0 0
        %253 = vperm.xlu0 %252, %v229
        %v254 = vpop.permute.xlu0 %253
        %257 = vset.pattern.permute.xlu0 0
        %258 = vperm.xlu0 %257, %v230
        %v259 = vpop.permute.xlu0 %258
        %262 = vset.pattern.permute.xlu0 0
        %263 = vperm.xlu0 %262, %v231
        %v264 = vpop.permute.xlu0 %263
        %v266 = vsub.f32 %v242, %v249
        %v267 = vsub.f32 %v243, %v249
        %v268 = vsub.f32 %v244, %v249
        %v269 = vsub.f32 %v245, %v249
        %v270 = vsub.f32 %v242, %v254
        %v271 = vsub.f32 %v243, %v254
        %v272 = vsub.f32 %v244, %v254
        %v273 = vsub.f32 %v245, %v254
        %v274 = vsub.f32 %v242, %v259
        %v275 = vsub.f32 %v243, %v259
        %v276 = vsub.f32 %v244, %v259
        %v277 = vsub.f32 %v245, %v259
        %v278 = vsub.f32 %v242, %v264
        %v279 = vsub.f32 %v243, %v264
        %v280 = vsub.f32 %v244, %v264
        %v281 = vsub.f32 %v245, %v264
        %v282 = vperm.slane %v226, 1
        %v283 = vperm.slane %v226, 5
        %v284 = vperm.slane %v227, 1
        %v285 = vperm.slane %v227, 5
        %v290 = vperm.slane %v282, 1
        %v291 = vperm.slane %v283, 1
        %v292 = vperm.slane %v284, 1
        %v293 = vperm.slane %v285, 1
        %294 = vset.pattern.permute.xlu0 1
        %295 = vperm.xlu0 %294, %v228
        %v296 = vpop.permute.xlu0 %295
        %298 = vset.pattern.permute.xlu0 1
        %299 = vperm.xlu0 %298, %v229
        %v300 = vpop.permute.xlu0 %299
        %302 = vset.pattern.permute.xlu0 1
        %303 = vperm.xlu0 %302, %v230
        %v304 = vpop.permute.xlu0 %303
        %306 = vset.pattern.permute.xlu0 1
        %307 = vperm.xlu0 %306, %v231
        %v308 = vpop.permute.xlu0 %307
        %v310 = vsub.f32 %v290, %v296
        %v311 = vsub.f32 %v291, %v296
        %v312 = vsub.f32 %v292, %v296
        %v313 = vsub.f32 %v293, %v296
        %v314 = vsub.f32 %v290, %v300
        %v315 = vsub.f32 %v291, %v300
        %v316 = vsub.f32 %v292, %v300
        %v317 = vsub.f32 %v293, %v300
        %v318 = vsub.f32 %v290, %v304
        %v319 = vsub.f32 %v291, %v304
        %v320 = vsub.f32 %v292, %v304
        %v321 = vsub.f32 %v293, %v304
        %v322 = vsub.f32 %v290, %v308
        %v323 = vsub.f32 %v291, %v308
        %v324 = vsub.f32 %v292, %v308
        %v325 = vsub.f32 %v293, %v308
        %v326 = vmul.f32 %v266, %v266
        %v327 = vmul.f32 %v267, %v267
        %v328 = vmul.f32 %v268, %v268
        %v329 = vmul.f32 %v269, %v269
        %v330 = vmul.f32 %v270, %v270
        %v331 = vmul.f32 %v271, %v271
        %v332 = vmul.f32 %v272, %v272
        %v333 = vmul.f32 %v273, %v273
        %v334 = vmul.f32 %v274, %v274
        %v335 = vmul.f32 %v275, %v275
        %v336 = vmul.f32 %v276, %v276
        %v337 = vmul.f32 %v277, %v277
        %v338 = vmul.f32 %v278, %v278
        %v339 = vmul.f32 %v279, %v279
        %v340 = vmul.f32 %v280, %v280
        %v341 = vmul.f32 %v281, %v281
        %v342 = vmul.f32 %v310, %v310
        %v343 = vmul.f32 %v311, %v311
        %v344 = vmul.f32 %v312, %v312
        %v345 = vmul.f32 %v313, %v313
        %v346 = vmul.f32 %v314, %v314
        %v347 = vmul.f32 %v315, %v315
        %v348 = vmul.f32 %v316, %v316
        %v349 = vmul.f32 %v317, %v317
        %v350 = vmul.f32 %v318, %v318
        %v351 = vmul.f32 %v319, %v319
        %v352 = vmul.f32 %v320, %v320
        %v353 = vmul.f32 %v321, %v321
        %v354 = vmul.f32 %v322, %v322
        %v355 = vmul.f32 %v323, %v323
        %v356 = vmul.f32 %v324, %v324
        %v357 = vmul.f32 %v325, %v325
        %v358 = vadd.f32 %v326, %v342
        %v359 = vadd.f32 %v327, %v343
        %v360 = vadd.f32 %v328, %v344
        %v361 = vadd.f32 %v329, %v345
        %v362 = vadd.f32 %v330, %v346
        %v363 = vadd.f32 %v331, %v347
        %v364 = vadd.f32 %v332, %v348
        %v365 = vadd.f32 %v333, %v349
        %v366 = vadd.f32 %v334, %v350
        %v367 = vadd.f32 %v335, %v351
        %v368 = vadd.f32 %v336, %v352
        %v369 = vadd.f32 %v337, %v353
        %v370 = vadd.f32 %v338, %v354
        %v371 = vadd.f32 %v339, %v355
        %v372 = vadd.f32 %v340, %v356
        %v373 = vadd.f32 %v341, %v357
        %374 = vset.pattern.permute.xlu0 2
        %375 = vperm.xlu0 %374, %v228
        %v376 = vpop.permute.xlu0 %375
        %378 = vset.pattern.permute.xlu0 2
        %379 = vperm.xlu0 %378, %v229
        %v380 = vpop.permute.xlu0 %379
        %382 = vset.pattern.permute.xlu0 2
        %383 = vperm.xlu0 %382, %v230
        %v384 = vpop.permute.xlu0 %383
        %386 = vset.pattern.permute.xlu0 2
        %387 = vperm.xlu0 %386, %v231
        %v388 = vpop.permute.xlu0 %387
        %v390 = vmul.f32 %v358, %v376
        %v391 = vmul.f32 %v359, %v376
        %v392 = vmul.f32 %v360, %v376
        %v393 = vmul.f32 %v361, %v376
        %v394 = vmul.f32 %v362, %v380
        %v395 = vmul.f32 %v363, %v380
        %v396 = vmul.f32 %v364, %v380
        %v397 = vmul.f32 %v365, %v380
        %v398 = vmul.f32 %v366, %v384
        %v399 = vmul.f32 %v367, %v384
        %v400 = vmul.f32 %v368, %v384
        %v401 = vmul.f32 %v369, %v384
        %v402 = vmul.f32 %v370, %v388
        %v403 = vmul.f32 %v371, %v388
        %v404 = vmul.f32 %v372, %v388
        %v405 = vmul.f32 %v373, %v388
        %v406 = vmul.f32 %v390, 1.442695
        %v407 = vpow.pop %v406
        %v408 = vmul.f32 %v391, 1.442695
        %v409 = vpow.pop %v408
        %v410 = vmul.f32 %v392, 1.442695
        %v411 = vpow.pop %v410
        %v412 = vmul.f32 %v393, 1.442695
        %v413 = vpow.pop %v412
        %v414 = vmul.f32 %v394, 1.442695
        %v415 = vpow.pop %v414
        %v416 = vmul.f32 %v395, 1.442695
        %v417 = vpow.pop %v416
        %v418 = vmul.f32 %v396, 1.442695
        %v419 = vpow.pop %v418
        %v420 = vmul.f32 %v397, 1.442695
        %v421 = vpow.pop %v420
        %v422 = vmul.f32 %v398, 1.442695
        %v423 = vpow.pop %v422
        %v424 = vmul.f32 %v399, 1.442695
        %v425 = vpow.pop %v424
        %v426 = vmul.f32 %v400, 1.442695
        %v427 = vpow.pop %v426
        %v428 = vmul.f32 %v401, 1.442695
        %v429 = vpow.pop %v428
        %v430 = vmul.f32 %v402, 1.442695
        %v431 = vpow.pop %v430
        %v432 = vmul.f32 %v403, 1.442695
        %v433 = vpow.pop %v432
        %v434 = vmul.f32 %v404, 1.442695
        %v435 = vpow.pop %v434
        %v436 = vmul.f32 %v405, 1.442695
        %v437 = vpow.pop %v436
        %v438 = vand.u32 2147483647, %v226
        %vm439 = vcmp.le.f32.partialorder %v438, 0.7853982
        %vm440 = vcmp.lt.s32.totalorder %v226, 0
        %v441 = vand.u32 %v226, 2139095040
        %v442 = vshrl.u32 %v441, 23
        %v443 = vsub.s32 %v442, 127
        %v444 = vand.u32 2147483647, %v226
        %v445 = vand.u32 %v444, 8388607
        %v446 = vor.u32 %v445, 8388608
        %v447 = vsub.s32 0, %v446
        %v448 = vadd.s32 %v443, 1
        %vm449 = vcmp.gt.s32.totalorder %v448, 0
        %v450 = vsel %vm449, %v448, 0
        %v451 = vshrl.u32 %v450, 5
        %v452 = vand.u32 %v450, 31
        %v453 = vsub.s32 32, %v452
        %v454 = vshrl.u32 683565275, %v453
        %v455 = vshll.u32 683565275, %v452
        %v456 = vshrl.u32 2475754826, %v453
        %v457 = vor.u32 %v455, %v456
        %v458 = vshll.u32 2475754826, %v452
        %v459 = vshrl.u32 2131351028, %v453
        %v460 = vor.u32 %v458, %v459
        %v461 = vshll.u32 2131351028, %v452
        %v462 = vshrl.u32 2102212464, %v453
        %v463 = vor.u32 %v461, %v462
        %v464 = vshll.u32 2102212464, %v452
        %v465 = vshrl.u32 920167782, %v453
        %v466 = vor.u32 %v464, %v465
        %v467 = vshll.u32 920167782, %v452
        %v468 = vshrl.u32 1326507024, %v453
        %v469 = vor.u32 %v467, %v468
        %vm470 = vcmp.lt.s32.totalorder %v451, 1
        %vm471 = vcmp.lt.s32.totalorder %v451, 2
        %vm472 = vcmp.lt.s32.totalorder %v451, 3
        %vm473 = vcmp.lt.s32.totalorder %v451, 4
        %v474 = vsel %vm470, %v454, %v457
        %v475 = vsel %vm473, %v463, 2102212464
        %v476 = vsel %vm472, %v460, %v475
        %v477 = vsel %vm471, %v474, %v476
        %v478 = vsel %vm470, %v457, %v460
        %v479 = vsel %vm473, %v466, 920167782
        %v480 = vsel %vm472, %v463, %v479
        %v481 = vsel %vm471, %v478, %v480
        %v482 = vsel %vm470, %v460, %v463
        %v483 = vsel %vm473, %v469, 1326507024
        %v484 = vsel %vm472, %v466, %v483
        %v485 = vsel %vm471, %v482, %v484
        %v486 = vshll.u32 %v446, 8
        %v487 = vand.u32 %v486, 65535
        %v488 = vshrl.u32 %v486, 16
        %v489 = vand.u32 %v485, 65535
        %v490 = vshrl.u32 %v485, 16
        %v491 = vmul.u32 %v487, %v489
        %v492 = vmul.u32 %v487, %v490
        %v493 = vmul.u32 %v488, %v489
        %v494 = vmul.u32 %v488, %v490
        %v495 = vshll.u32 %v492, 16
        %v496 = vshrl.u32 %v492, 16
        %v497 = vshll.u32 %v493, 16
        %v498 = vshrl.u32 %v493, 16
        %vm499 = vc.u32 %v491, %v495
        %v500 = vsel %vm499, 1, 0
        %v501 = vadd.s32 %v491, %v495
        %v502 = vadd.s32 %v494, %v500
        %vm503 = vc.u32 %v501, %v497
        %v504 = vsel %vm503, 1, 0
        %v505 = vadd.s32 %v501, %v497
        %v506 = vadd.s32 %v502, %v504
        %v507 = vadd.s32 %v506, %v496
        %v508 = vadd.s32 %v507, %v498
        %v509 = vand.u32 %v486, 65535
        %v510 = vshrl.u32 %v486, 16
        %v511 = vand.u32 %v481, 65535
        %v512 = vshrl.u32 %v481, 16
        %v513 = vmul.u32 %v509, %v511
        %v514 = vmul.u32 %v509, %v512
        %v515 = vmul.u32 %v510, %v511
        %v516 = vmul.u32 %v510, %v512
        %v517 = vshll.u32 %v514, 16
        %v518 = vshrl.u32 %v514, 16
        %v519 = vshll.u32 %v515, 16
        %v520 = vshrl.u32 %v515, 16
        %vm521 = vc.u32 %v513, %v517
        %v522 = vsel %vm521, 1, 0
        %v523 = vadd.s32 %v513, %v517
        %v524 = vadd.s32 %v516, %v522
        %vm525 = vc.u32 %v523, %v519
        %v526 = vsel %vm525, 1, 0
        %v527 = vadd.s32 %v523, %v519
        %v528 = vadd.s32 %v524, %v526
        %v529 = vadd.s32 %v528, %v518
        %v530 = vadd.s32 %v529, %v520
        %v531 = vmul.u32 %v486, %v477
        %v532 = vadd.s32 %v508, %v527
        %vm533 = vc.u32 %v508, %v527
        %v534 = vadd.s32 %v530, 1
        %v535 = vsel %vm533, %v534, %v530
        %v536 = vadd.s32 %v531, %v535
        %v537 = vadd.s32 %v536, 536870912
        %v538 = vshrl.u32 %v537, 30
        %v539 = vshll.u32 %v538, 30
        %v540 = vsub.s32 %v536, %v539
        %vm541 = vcmp.lt.s32.totalorder %v540, 0
        %v542 = vsub.s32 0, %v540
        %v543 = vsel %vm541, %v542, %v540
        %v544 = vclz %v543
        %v545 = vsub.s32 %v544, 2
        %vm546 = vcmp.gt.s32.totalorder 0, %v545
        %v547 = vsel %vm546, 0, %v545
        %v548 = vsub.s32 32, %v547
        %v549 = vshll.u32 %v540, %v547
        %v550 = vshrl.u32 %v532, %v548
        %v551 = vor.u32 %v549, %v550
        %v552 = vsub.s32 4294967266, %v547
        %v553 = vadd.s32 %v552, 127
        %v554 = vshll.u32 %v553, 23
        %v555 = vor.u32 4788187, %v554
        %v556 = vand.u32 2147483647, %v555
        %v558 = vcvt.s32.f32 %v551
        %v559 = vmul.f32 %v558, %v556
        %v560 = vxor.u32 %v559, 2147483648
        %v561 = vsel %vm440, %v560, %v559
        %v562 = vsub.s32 4, %v538
        %v563 = vsel %vm440, %v562, %v538
        %v564 = vsel %vm439, %v226, %v561
        %v565 = vsel %vm439, 0, %v563
        %v566 = vmul.f32 %v564, %v564
        %v567 = vmul.f32 %v566, -0.001358992
        %v568 = vadd.f32 %v567, 0.041655596
        %v569 = vmul.f32 %v566, %v568
        %v570 = vadd.f32 %v569, -0.4999988
        %v571 = vmul.f32 %v566, %v570
        %v572 = vadd.f32 1.0, %v571
        %v573 = vmul.f32 %v564, %v564
        %v574 = vmul.f32 %v573, -0.00019511016
        %v575 = vadd.f32 %v574, 0.008332121
        %v576 = vmul.f32 %v573, %v575
        %v577 = vadd.f32 %v576, -0.16666654
        %v578 = vmul.f32 %v573, %v577
        %v579 = vadd.f32 %v578, 1.0
        %v580 = vmul.f32 %v579, %v564
        %vm581 = vweird.f32 %v226
        %v582 = vadd.s32 %v565, 3
        %v583 = vand.u32 %v582, 3
        %vm584 = vcmp.lt.s32.totalorder %v583, 2
        %vm585 = vcmp.eq.s32.totalorder %v583, 0
        %v586 = vxor.u32 %v580, 2147483648
        %v587 = vsel %vm585, %v572, %v586
        %vm588 = vcmp.eq.s32.totalorder %v583, 2
        %v589 = vxor.u32 %v572, 2147483648
        %v590 = vsel %vm588, %v589, %v580
        %v591 = vsel %vm584, %v587, %v590
        %v592 = vsel %vm581, nan, %v591
        %v593 = vand.u32 2147483647, %v227
        %vm594 = vcmp.le.f32.partialorder %v593, 0.7853982
        %vm595 = vcmp.lt.s32.totalorder %v227, 0
        %v596 = vand.u32 %v227, 2139095040
        %v597 = vshrl.u32 %v596, 23
        %v598 = vsub.s32 %v597, 127
        %v599 = vand.u32 2147483647, %v227
        %v600 = vand.u32 %v599, 8388607
        %v601 = vor.u32 %v600, 8388608
        %v602 = vsub.s32 0, %v601
        %v603 = vadd.s32 %v598, 1
        %vm604 = vcmp.gt.s32.totalorder %v603, 0
        %v605 = vsel %vm604, %v603, 0
        %v606 = vshrl.u32 %v605, 5
        %v607 = vand.u32 %v605, 31
        %v608 = vsub.s32 32, %v607
        %v609 = vshrl.u32 683565275, %v608
        %v610 = vshll.u32 683565275, %v607
        %v611 = vshrl.u32 2475754826, %v608
        %v612 = vor.u32 %v610, %v611
        %v613 = vshll.u32 2475754826, %v607
        %v614 = vshrl.u32 2131351028, %v608
        %v615 = vor.u32 %v613, %v614
        %v616 = vshll.u32 2131351028, %v607
        %v617 = vshrl.u32 2102212464, %v608
        %v618 = vor.u32 %v616, %v617
        %v619 = vshll.u32 2102212464, %v607
        %v620 = vshrl.u32 920167782, %v608
        %v621 = vor.u32 %v619, %v620
        %v622 = vshll.u32 920167782, %v607
        %v623 = vshrl.u32 1326507024, %v608
        %v624 = vor.u32 %v622, %v623
        %vm625 = vcmp.lt.s32.totalorder %v606, 1
        %vm626 = vcmp.lt.s32.totalorder %v606, 2
        %vm627 = vcmp.lt.s32.totalorder %v606, 3
        %vm628 = vcmp.lt.s32.totalorder %v606, 4
        %v629 = vsel %vm625, %v609, %v612
        %v630 = vsel %vm628, %v618, 2102212464
        %v631 = vsel %vm627, %v615, %v630
        %v632 = vsel %vm626, %v629, %v631
        %v633 = vsel %vm625, %v612, %v615
        %v634 = vsel %vm628, %v621, 920167782
        %v635 = vsel %vm627, %v618, %v634
        %v636 = vsel %vm626, %v633, %v635
        %v637 = vsel %vm625, %v615, %v618
        %v638 = vsel %vm628, %v624, 1326507024
        %v639 = vsel %vm627, %v621, %v638
        %v640 = vsel %vm626, %v637, %v639
        %v641 = vshll.u32 %v601, 8
        %v642 = vand.u32 %v641, 65535
        %v643 = vshrl.u32 %v641, 16
        %v644 = vand.u32 %v640, 65535
        %v645 = vshrl.u32 %v640, 16
        %v646 = vmul.u32 %v642, %v644
        %v647 = vmul.u32 %v642, %v645
        %v648 = vmul.u32 %v643, %v644
        %v649 = vmul.u32 %v643, %v645
        %v650 = vshll.u32 %v647, 16
        %v651 = vshrl.u32 %v647, 16
        %v652 = vshll.u32 %v648, 16
        %v653 = vshrl.u32 %v648, 16
        %vm654 = vc.u32 %v646, %v650
        %v655 = vsel %vm654, 1, 0
        %v656 = vadd.s32 %v646, %v650
        %v657 = vadd.s32 %v649, %v655
        %vm658 = vc.u32 %v656, %v652
        %v659 = vsel %vm658, 1, 0
        %v660 = vadd.s32 %v656, %v652
        %v661 = vadd.s32 %v657, %v659
        %v662 = vadd.s32 %v661, %v651
        %v663 = vadd.s32 %v662, %v653
        %v664 = vand.u32 %v641, 65535
        %v665 = vshrl.u32 %v641, 16
        %v666 = vand.u32 %v636, 65535
        %v667 = vshrl.u32 %v636, 16
        %v668 = vmul.u32 %v664, %v666
        %v669 = vmul.u32 %v664, %v667
        %v670 = vmul.u32 %v665, %v666
        %v671 = vmul.u32 %v665, %v667
        %v672 = vshll.u32 %v669, 16
        %v673 = vshrl.u32 %v669, 16
        %v674 = vshll.u32 %v670, 16
        %v675 = vshrl.u32 %v670, 16
        %vm676 = vc.u32 %v668, %v672
        %v677 = vsel %vm676, 1, 0
        %v678 = vadd.s32 %v668, %v672
        %v679 = vadd.s32 %v671, %v677
        %vm680 = vc.u32 %v678, %v674
        %v681 = vsel %vm680, 1, 0
        %v682 = vadd.s32 %v678, %v674
        %v683 = vadd.s32 %v679, %v681
        %v684 = vadd.s32 %v683, %v673
        %v685 = vadd.s32 %v684, %v675
        %v686 = vmul.u32 %v641, %v632
        %v687 = vadd.s32 %v663, %v682
        %vm688 = vc.u32 %v663, %v682
        %v689 = vadd.s32 %v685, 1
        %v690 = vsel %vm688, %v689, %v685
        %v691 = vadd.s32 %v686, %v690
        %v692 = vadd.s32 %v691, 536870912
        %v693 = vshrl.u32 %v692, 30
        %v694 = vshll.u32 %v693, 30
        %v695 = vsub.s32 %v691, %v694
        %vm696 = vcmp.lt.s32.totalorder %v695, 0
        %v697 = vsub.s32 0, %v695
        %v698 = vsel %vm696, %v697, %v695
        %v699 = vclz %v698
        %v700 = vsub.s32 %v699, 2
        %vm701 = vcmp.gt.s32.totalorder 0, %v700
        %v702 = vsel %vm701, 0, %v700
        %v703 = vsub.s32 32, %v702
        %v704 = vshll.u32 %v695, %v702
        %v705 = vshrl.u32 %v687, %v703
        %v706 = vor.u32 %v704, %v705
        %v707 = vsub.s32 4294967266, %v702
        %v708 = vadd.s32 %v707, 127
        %v709 = vshll.u32 %v708, 23
        %v710 = vor.u32 4788187, %v709
        %v711 = vand.u32 2147483647, %v710
        %v713 = vcvt.s32.f32 %v706
        %v714 = vmul.f32 %v713, %v711
        %v715 = vxor.u32 %v714, 2147483648
        %v716 = vsel %vm595, %v715, %v714
        %v717 = vsub.s32 4, %v693
        %v718 = vsel %vm595, %v717, %v693
        %v719 = vsel %vm594, %v227, %v716
        %v720 = vsel %vm594, 0, %v718
        %v721 = vmul.f32 %v719, %v719
        %v722 = vmul.f32 %v721, -0.001358992
        %v723 = vadd.f32 %v722, 0.041655596
        %v724 = vmul.f32 %v721, %v723
        %v725 = vadd.f32 %v724, -0.4999988
        %v726 = vmul.f32 %v721, %v725
        %v727 = vadd.f32 1.0, %v726
        %v728 = vmul.f32 %v719, %v719
        %v729 = vmul.f32 %v728, -0.00019511016
        %v730 = vadd.f32 %v729, 0.008332121
        %v731 = vmul.f32 %v728, %v730
        %v732 = vadd.f32 %v731, -0.16666654
        %v733 = vmul.f32 %v728, %v732
        %v734 = vadd.f32 %v733, 1.0
        %v735 = vmul.f32 %v734, %v719
        %vm736 = vweird.f32 %v227
        %v737 = vadd.s32 %v720, 3
        %v738 = vand.u32 %v737, 3
        %vm739 = vcmp.lt.s32.totalorder %v738, 2
        %vm740 = vcmp.eq.s32.totalorder %v738, 0
        %v741 = vxor.u32 %v735, 2147483648
        %v742 = vsel %vm740, %v727, %v741
        %vm743 = vcmp.eq.s32.totalorder %v738, 2
        %v744 = vxor.u32 %v727, 2147483648
        %v745 = vsel %vm743, %v744, %v735
        %v746 = vsel %vm739, %v742, %v745
        %v747 = vsel %vm736, nan, %v746
        %v748 = vand.u32 2147483647, %v226
        %vm749 = vcmp.le.f32.partialorder %v748, 0.7853982
        %vm750 = vcmp.lt.s32.totalorder %v226, 0
        %v751 = vand.u32 %v226, 2139095040
        %v752 = vshrl.u32 %v751, 23
        %v753 = vsub.s32 %v752, 127
        %v754 = vand.u32 2147483647, %v226
        %v755 = vand.u32 %v754, 8388607
        %v756 = vor.u32 %v755, 8388608
        %v757 = vsub.s32 0, %v756
        %v758 = vadd.s32 %v753, 1
        %vm759 = vcmp.gt.s32.totalorder %v758, 0
        %v760 = vsel %vm759, %v758, 0
        %v761 = vshrl.u32 %v760, 5
        %v762 = vand.u32 %v760, 31
        %v763 = vsub.s32 32, %v762
        %v764 = vshrl.u32 683565275, %v763
        %v765 = vshll.u32 683565275, %v762
        %v766 = vshrl.u32 2475754826, %v763
        %v767 = vor.u32 %v765, %v766
        %v768 = vshll.u32 2475754826, %v762
        %v769 = vshrl.u32 2131351028, %v763
        %v770 = vor.u32 %v768, %v769
        %v771 = vshll.u32 2131351028, %v762
        %v772 = vshrl.u32 2102212464, %v763
        %v773 = vor.u32 %v771, %v772
        %v774 = vshll.u32 2102212464, %v762
        %v775 = vshrl.u32 920167782, %v763
        %v776 = vor.u32 %v774, %v775
        %v777 = vshll.u32 920167782, %v762
        %v778 = vshrl.u32 1326507024, %v763
        %v779 = vor.u32 %v777, %v778
        %vm780 = vcmp.lt.s32.totalorder %v761, 1
        %vm781 = vcmp.lt.s32.totalorder %v761, 2
        %vm782 = vcmp.lt.s32.totalorder %v761, 3
        %vm783 = vcmp.lt.s32.totalorder %v761, 4
        %v784 = vsel %vm780, %v764, %v767
        %v785 = vsel %vm783, %v773, 2102212464
        %v786 = vsel %vm782, %v770, %v785
        %v787 = vsel %vm781, %v784, %v786
        %v788 = vsel %vm780, %v767, %v770
        %v789 = vsel %vm783, %v776, 920167782
        %v790 = vsel %vm782, %v773, %v789
        %v791 = vsel %vm781, %v788, %v790
        %v792 = vsel %vm780, %v770, %v773
        %v793 = vsel %vm783, %v779, 1326507024
        %v794 = vsel %vm782, %v776, %v793
        %v795 = vsel %vm781, %v792, %v794
        %v796 = vshll.u32 %v756, 8
        %v797 = vand.u32 %v796, 65535
        %v798 = vshrl.u32 %v796, 16
        %v799 = vand.u32 %v795, 65535
        %v800 = vshrl.u32 %v795, 16
        %v801 = vmul.u32 %v797, %v799
        %v802 = vmul.u32 %v797, %v800
        %v803 = vmul.u32 %v798, %v799
        %v804 = vmul.u32 %v798, %v800
        %v805 = vshll.u32 %v802, 16
        %v806 = vshrl.u32 %v802, 16
        %v807 = vshll.u32 %v803, 16
        %v808 = vshrl.u32 %v803, 16
        %vm809 = vc.u32 %v801, %v805
        %v810 = vsel %vm809, 1, 0
        %v811 = vadd.s32 %v801, %v805
        %v812 = vadd.s32 %v804, %v810
        %vm813 = vc.u32 %v811, %v807
        %v814 = vsel %vm813, 1, 0
        %v815 = vadd.s32 %v811, %v807
        %v816 = vadd.s32 %v812, %v814
        %v817 = vadd.s32 %v816, %v806
        %v818 = vadd.s32 %v817, %v808
        %v819 = vand.u32 %v796, 65535
        %v820 = vshrl.u32 %v796, 16
        %v821 = vand.u32 %v791, 65535
        %v822 = vshrl.u32 %v791, 16
        %v823 = vmul.u32 %v819, %v821
        %v824 = vmul.u32 %v819, %v822
        %v825 = vmul.u32 %v820, %v821
        %v826 = vmul.u32 %v820, %v822
        %v827 = vshll.u32 %v824, 16
        %v828 = vshrl.u32 %v824, 16
        %v829 = vshll.u32 %v825, 16
        %v830 = vshrl.u32 %v825, 16
        %vm831 = vc.u32 %v823, %v827
        %v832 = vsel %vm831, 1, 0
        %v833 = vadd.s32 %v823, %v827
        %v834 = vadd.s32 %v826, %v832
        %vm835 = vc.u32 %v833, %v829
        %v836 = vsel %vm835, 1, 0
        %v837 = vadd.s32 %v833, %v829
        %v838 = vadd.s32 %v834, %v836
        %v839 = vadd.s32 %v838, %v828
        %v840 = vadd.s32 %v839, %v830
        %v841 = vmul.u32 %v796, %v787
        %v842 = vadd.s32 %v818, %v837
        %vm843 = vc.u32 %v818, %v837
        %v844 = vadd.s32 %v840, 1
        %v845 = vsel %vm843, %v844, %v840
        %v846 = vadd.s32 %v841, %v845
        %v847 = vadd.s32 %v846, 536870912
        %v848 = vshrl.u32 %v847, 30
        %v849 = vshll.u32 %v848, 30
        %v850 = vsub.s32 %v846, %v849
        %vm851 = vcmp.lt.s32.totalorder %v850, 0
        %v852 = vsub.s32 0, %v850
        %v853 = vsel %vm851, %v852, %v850
        %v854 = vclz %v853
        %v855 = vsub.s32 %v854, 2
        %vm856 = vcmp.gt.s32.totalorder 0, %v855
        %v857 = vsel %vm856, 0, %v855
        %v858 = vsub.s32 32, %v857
        %v859 = vshll.u32 %v850, %v857
        %v860 = vshrl.u32 %v842, %v858
        %v861 = vor.u32 %v859, %v860
        %v862 = vsub.s32 4294967266, %v857
        %v863 = vadd.s32 %v862, 127
        %v864 = vshll.u32 %v863, 23
        %v865 = vor.u32 4788187, %v864
        %v866 = vand.u32 2147483647, %v865
        %v868 = vcvt.s32.f32 %v861
        %v869 = vmul.f32 %v868, %v866
        %v870 = vxor.u32 %v869, 2147483648
        %v871 = vsel %vm750, %v870, %v869
        %v872 = vsub.s32 4, %v848
        %v873 = vsel %vm750, %v872, %v848
        %v874 = vsel %vm749, %v226, %v871
        %v875 = vsel %vm749, 0, %v873
        %v876 = vmul.f32 %v874, %v874
        %v877 = vmul.f32 %v876, -0.001358992
        %v878 = vadd.f32 %v877, 0.041655596
        %v879 = vmul.f32 %v876, %v878
        %v880 = vadd.f32 %v879, -0.4999988
        %v881 = vmul.f32 %v876, %v880
        %v882 = vadd.f32 1.0, %v881
        %v883 = vmul.f32 %v874, %v874
        %v884 = vmul.f32 %v883, -0.00019511016
        %v885 = vadd.f32 %v884, 0.008332121
        %v886 = vmul.f32 %v883, %v885
        %v887 = vadd.f32 %v886, -0.16666654
        %v888 = vmul.f32 %v883, %v887
        %v889 = vadd.f32 %v888, 1.0
        %v890 = vmul.f32 %v889, %v874
        %vm891 = vweird.f32 %v226
        %v892 = vand.u32 %v875, 3
        %vm893 = vcmp.lt.s32.totalorder %v892, 2
        %vm894 = vcmp.eq.s32.totalorder %v892, 0
        %v895 = vxor.u32 %v890, 2147483648
        %v896 = vsel %vm894, %v882, %v895
        %vm897 = vcmp.eq.s32.totalorder %v892, 2
        %v898 = vxor.u32 %v882, 2147483648
        %v899 = vsel %vm897, %v898, %v890
        %v900 = vsel %vm893, %v896, %v899
        %v901 = vsel %vm891, nan, %v900
        %v902 = vand.u32 2147483647, %v227
        %vm903 = vcmp.le.f32.partialorder %v902, 0.7853982
        %vm904 = vcmp.lt.s32.totalorder %v227, 0
        %v905 = vand.u32 %v227, 2139095040
        %v906 = vshrl.u32 %v905, 23
        %v907 = vsub.s32 %v906, 127
        %v908 = vand.u32 2147483647, %v227
        %v909 = vand.u32 %v908, 8388607
        %v910 = vor.u32 %v909, 8388608
        %v911 = vsub.s32 0, %v910
        %v912 = vadd.s32 %v907, 1
        %vm913 = vcmp.gt.s32.totalorder %v912, 0
        %v914 = vsel %vm913, %v912, 0
        %v915 = vshrl.u32 %v914, 5
        %v916 = vand.u32 %v914, 31
        %v917 = vsub.s32 32, %v916
        %v918 = vshrl.u32 683565275, %v917
        %v919 = vshll.u32 683565275, %v916
        %v920 = vshrl.u32 2475754826, %v917
        %v921 = vor.u32 %v919, %v920
        %v922 = vshll.u32 2475754826, %v916
        %v923 = vshrl.u32 2131351028, %v917
        %v924 = vor.u32 %v922, %v923
        %v925 = vshll.u32 2131351028, %v916
        %v926 = vshrl.u32 2102212464, %v917
        %v927 = vor.u32 %v925, %v926
        %v928 = vshll.u32 2102212464, %v916
        %v929 = vshrl.u32 920167782, %v917
        %v930 = vor.u32 %v928, %v929
        %v931 = vshll.u32 920167782, %v916
        %v932 = vshrl.u32 1326507024, %v917
        %v933 = vor.u32 %v931, %v932
        %vm934 = vcmp.lt.s32.totalorder %v915, 1
        %vm935 = vcmp.lt.s32.totalorder %v915, 2
        %vm936 = vcmp.lt.s32.totalorder %v915, 3
        %vm937 = vcmp.lt.s32.totalorder %v915, 4
        %v938 = vsel %vm934, %v918, %v921
        %v939 = vsel %vm937, %v927, 2102212464
        %v940 = vsel %vm936, %v924, %v939
        %v941 = vsel %vm935, %v938, %v940
        %v942 = vsel %vm934, %v921, %v924
        %v943 = vsel %vm937, %v930, 920167782
        %v944 = vsel %vm936, %v927, %v943
        %v945 = vsel %vm935, %v942, %v944
        %v946 = vsel %vm934, %v924, %v927
        %v947 = vsel %vm937, %v933, 1326507024
        %v948 = vsel %vm936, %v930, %v947
        %v949 = vsel %vm935, %v946, %v948
        %v950 = vshll.u32 %v910, 8
        %v951 = vand.u32 %v950, 65535
        %v952 = vshrl.u32 %v950, 16
        %v953 = vand.u32 %v949, 65535
        %v954 = vshrl.u32 %v949, 16
        %v955 = vmul.u32 %v951, %v953
        %v956 = vmul.u32 %v951, %v954
        %v957 = vmul.u32 %v952, %v953
        %v958 = vmul.u32 %v952, %v954
        %v959 = vshll.u32 %v956, 16
        %v960 = vshrl.u32 %v956, 16
        %v961 = vshll.u32 %v957, 16
        %v962 = vshrl.u32 %v957, 16
        %vm963 = vc.u32 %v955, %v959
        %v964 = vsel %vm963, 1, 0
        %v965 = vadd.s32 %v955, %v959
        %v966 = vadd.s32 %v958, %v964
        %vm967 = vc.u32 %v965, %v961
        %v968 = vsel %vm967, 1, 0
        %v969 = vadd.s32 %v965, %v961
        %v970 = vadd.s32 %v966, %v968
        %v971 = vadd.s32 %v970, %v960
        %v972 = vadd.s32 %v971, %v962
        %v973 = vand.u32 %v950, 65535
        %v974 = vshrl.u32 %v950, 16
        %v975 = vand.u32 %v945, 65535
        %v976 = vshrl.u32 %v945, 16
        %v977 = vmul.u32 %v973, %v975
        %v978 = vmul.u32 %v973, %v976
        %v979 = vmul.u32 %v974, %v975
        %v980 = vmul.u32 %v974, %v976
        %v981 = vshll.u32 %v978, 16
        %v982 = vshrl.u32 %v978, 16
        %v983 = vshll.u32 %v979, 16
        %v984 = vshrl.u32 %v979, 16
        %vm985 = vc.u32 %v977, %v981
        %v986 = vsel %vm985, 1, 0
        %v987 = vadd.s32 %v977, %v981
        %v988 = vadd.s32 %v980, %v986
        %vm989 = vc.u32 %v987, %v983
        %v990 = vsel %vm989, 1, 0
        %v991 = vadd.s32 %v987, %v983
        %v992 = vadd.s32 %v988, %v990
        %v993 = vadd.s32 %v992, %v982
        %v994 = vadd.s32 %v993, %v984
        %v995 = vmul.u32 %v950, %v941
        %v996 = vadd.s32 %v972, %v991
        %vm997 = vc.u32 %v972, %v991
        %v998 = vadd.s32 %v994, 1
        %v999 = vsel %vm997, %v998, %v994
        %v1000 = vadd.s32 %v995, %v999
        %v1001 = vadd.s32 %v1000, 536870912
        %v1002 = vshrl.u32 %v1001, 30
        %v1003 = vshll.u32 %v1002, 30
        %v1004 = vsub.s32 %v1000, %v1003
        %vm1005 = vcmp.lt.s32.totalorder %v1004, 0
        %v1006 = vsub.s32 0, %v1004
        %v1007 = vsel %vm1005, %v1006, %v1004
        %v1008 = vclz %v1007
        %v1009 = vsub.s32 %v1008, 2
        %vm1010 = vcmp.gt.s32.totalorder 0, %v1009
        %v1011 = vsel %vm1010, 0, %v1009
        %v1012 = vsub.s32 32, %v1011
        %v1013 = vshll.u32 %v1004, %v1011
        %v1014 = vshrl.u32 %v996, %v1012
        %v1015 = vor.u32 %v1013, %v1014
        %v1016 = vsub.s32 4294967266, %v1011
        %v1017 = vadd.s32 %v1016, 127
        %v1018 = vshll.u32 %v1017, 23
        %v1019 = vor.u32 4788187, %v1018
        %v1020 = vand.u32 2147483647, %v1019
        %v1022 = vcvt.s32.f32 %v1015
        %v1023 = vmul.f32 %v1022, %v1020
        %v1024 = vxor.u32 %v1023, 2147483648
        %v1025 = vsel %vm904, %v1024, %v1023
        %v1026 = vsub.s32 4, %v1002
        %v1027 = vsel %vm904, %v1026, %v1002
        %v1028 = vsel %vm903, %v227, %v1025
        %v1029 = vsel %vm903, 0, %v1027
        %v1030 = vmul.f32 %v1028, %v1028
        %v1031 = vmul.f32 %v1030, -0.001358992
        %v1032 = vadd.f32 %v1031, 0.041655596
        %v1033 = vmul.f32 %v1030, %v1032
        %v1034 = vadd.f32 %v1033, -0.4999988
        %v1035 = vmul.f32 %v1030, %v1034
        %v1036 = vadd.f32 1.0, %v1035
        %v1037 = vmul.f32 %v1028, %v1028
        %v1038 = vmul.f32 %v1037, -0.00019511016
        %v1039 = vadd.f32 %v1038, 0.008332121
        %v1040 = vmul.f32 %v1037, %v1039
        %v1041 = vadd.f32 %v1040, -0.16666654
        %v1042 = vmul.f32 %v1037, %v1041
        %v1043 = vadd.f32 %v1042, 1.0
        %v1044 = vmul.f32 %v1043, %v1028
        %vm1045 = vweird.f32 %v227
        %v1046 = vand.u32 %v1029, 3
        %vm1047 = vcmp.lt.s32.totalorder %v1046, 2
        %vm1048 = vcmp.eq.s32.totalorder %v1046, 0
        %v1049 = vxor.u32 %v1044, 2147483648
        %v1050 = vsel %vm1048, %v1036, %v1049
        %vm1051 = vcmp.eq.s32.totalorder %v1046, 2
        %v1052 = vxor.u32 %v1036, 2147483648
        %v1053 = vsel %vm1051, %v1052, %v1044
        %v1054 = vsel %vm1047, %v1050, %v1053
        %v1055 = vsel %vm1045, nan, %v1054
        %v1056 = vld [vmem:[%s3] sm:$0xff]
        %v1057 = vld [vmem:[%s3 + $0x8] sm:$0xff]
        %v1058 = vld [vmem:[%s3 + $0x10] sm:$0xff]
        %v1059 = vld [vmem:[%s3 + $0x18] sm:$0xff]
        %v1060 = vld [vmem:[%s3 + $0x20] sm:$0xff]
        %v1061 = vld [vmem:[%s3 + $0x28] sm:$0xff]
        %v1062 = vld [vmem:[%s3 + $0x30] sm:$0xff]
        %v1063 = vld [vmem:[%s3 + $0x38] sm:$0xff]
        %v1064 = vld [vmem:[%s2] sm:$0xff]
        %v1065 = vld [vmem:[%s2 + $0x8] sm:$0xff]
        %v1066 = vld [vmem:[%s2 + $0x10] sm:$0xff]
        %v1067 = vld [vmem:[%s2 + $0x18] sm:$0xff]
        %v1068 = vld [vmem:[%s2 + $0x20] sm:$0xff]
        %v1069 = vld [vmem:[%s2 + $0x28] sm:$0xff]
        %v1070 = vld [vmem:[%s2 + $0x30] sm:$0xff]
        %v1071 = vld [vmem:[%s2 + $0x38] sm:$0xff]
        %1073 = vset.pattern.permute.xlu0 0
        %1074 = vperm.xlu0 %1073, %v1056
        %v1075 = vpop.permute.xlu0 %1074
        %1078 = vset.pattern.permute.xlu0 0
        %1079 = vperm.xlu0 %1078, %v1057
        %v1080 = vpop.permute.xlu0 %1079
        %1083 = vset.pattern.permute.xlu0 0
        %1084 = vperm.xlu0 %1083, %v1058
        %v1085 = vpop.permute.xlu0 %1084
        %1088 = vset.pattern.permute.xlu0 0
        %1089 = vperm.xlu0 %1088, %v1059
        %v1090 = vpop.permute.xlu0 %1089
        %1093 = vset.pattern.permute.xlu0 0
        %1094 = vperm.xlu0 %1093, %v1060
        %v1095 = vpop.permute.xlu0 %1094
        %1098 = vset.pattern.permute.xlu0 0
        %1099 = vperm.xlu0 %1098, %v1061
        %v1100 = vpop.permute.xlu0 %1099
        %1103 = vset.pattern.permute.xlu0 0
        %1104 = vperm.xlu0 %1103, %v1062
        %v1105 = vpop.permute.xlu0 %1104
        %1108 = vset.pattern.permute.xlu0 0
        %1109 = vperm.xlu0 %1108, %v1063
        %v1110 = vpop.permute.xlu0 %1109
        %v1114 = vperm.slane %v592, 2
        %v1115 = vperm.slane %v592, 6
        %v1116 = vperm.slane %v747, 2
        %v1117 = vperm.slane %v747, 6
        %v1122 = vperm.slane %v1114, 2
        %v1123 = vperm.slane %v1115, 2
        %v1124 = vperm.slane %v1116, 2
        %v1125 = vperm.slane %v1117, 2
        %v1126 = vmul.f32 %v1075, %v1122
        %v1127 = vmul.f32 %v1075, %v1123
        %v1128 = vmul.f32 %v1075, %v1124
        %v1129 = vmul.f32 %v1075, %v1125
        %v1130 = vmul.f32 %v1080, %v1122
        %v1131 = vmul.f32 %v1080, %v1123
        %v1132 = vmul.f32 %v1080, %v1124
        %v1133 = vmul.f32 %v1080, %v1125
        %v1134 = vmul.f32 %v1085, %v1122
        %v1135 = vmul.f32 %v1085, %v1123
        %v1136 = vmul.f32 %v1085, %v1124
        %v1137 = vmul.f32 %v1085, %v1125
        %v1138 = vmul.f32 %v1090, %v1122
        %v1139 = vmul.f32 %v1090, %v1123
        %v1140 = vmul.f32 %v1090, %v1124
        %v1141 = vmul.f32 %v1090, %v1125
        %v1142 = vmul.f32 %v1095, %v1122
        %v1143 = vmul.f32 %v1095, %v1123
        %v1144 = vmul.f32 %v1095, %v1124
        %v1145 = vmul.f32 %v1095, %v1125
        %v1146 = vmul.f32 %v1100, %v1122
        %v1147 = vmul.f32 %v1100, %v1123
        %v1148 = vmul.f32 %v1100, %v1124
        %v1149 = vmul.f32 %v1100, %v1125
        %v1150 = vmul.f32 %v1105, %v1122
        %v1151 = vmul.f32 %v1105, %v1123
        %v1152 = vmul.f32 %v1105, %v1124
        %v1153 = vmul.f32 %v1105, %v1125
        %v1154 = vmul.f32 %v1110, %v1122
        %v1155 = vmul.f32 %v1110, %v1123
        %v1156 = vmul.f32 %v1110, %v1124
        %v1157 = vmul.f32 %v1110, %v1125
        %vm1158 = vcmask 261120
        %v1160 = vsel %vm1158, %v1064, 0
        %v1163 = vsel %vm1158, %v1065, 0
        %v1166 = vsel %vm1158, %v1066, 0
        %v1169 = vsel %vm1158, %v1067, 0
        %v1172 = vsel %vm1158, %v1068, 0
        %v1175 = vsel %vm1158, %v1069, 0
        %v1178 = vsel %vm1158, %v1070, 0
        %v1181 = vsel %vm1158, %v1071, 0
        %1183 = vmatpush.msra.mxu0 0.0
        %1184 = vmatpush.msra.mxu0 0.0
        %1185 = vmatpush.msra.mxu0 0.0
        %1186 = vmatpush.msra.mxu0 0.0
        %1187 = vmatpush.msra.mxu0 0.0
        %1188 = vmatpush.msra.mxu0 0.0
        %1189 = vmatpush.msra.mxu0 0.0
        %1190 = vmatpush.msra.mxu0 0.0
        %1191 = vmatpush.msra.mxu0 0.0
        %1192 = vmatpush.msra.mxu0 0.0
        %1193 = vmatpush.msra.mxu0 0.0
        %1194 = vmatpush.msra.mxu0 0.0
        %1195 = vmatpush.msra.mxu0 %v431
        %1196 = vmatpush.msra.mxu0 %v423
        %1197 = vmatpush.msra.mxu0 %v415
        %1198 = vmatpush.msra.mxu0 %v407
        %1199 = vmatmul.f32.gmra.mxu0 %v1160
        %v1200 = vpop.f32.mrf.mxu0
        %v1201 = vadd.f32 %v1126, %v1200
        %1202 = vmatmul.f32.gmra.mxu0 %v1163
        %v1203 = vpop.f32.mrf.mxu0
        %v1204 = vadd.f32 %v1130, %v1203
        %1205 = vmatmul.f32.gmra.mxu0 %v1166
        %v1206 = vpop.f32.mrf.mxu0
        %v1207 = vadd.f32 %v1134, %v1206
        %1208 = vmatmul.f32.gmra.mxu0 %v1169
        %v1209 = vpop.f32.mrf.mxu0
        %v1210 = vadd.f32 %v1138, %v1209
        %1211 = vmatmul.f32.gmra.mxu0 %v1172
        %v1212 = vpop.f32.mrf.mxu0
        %v1213 = vadd.f32 %v1142, %v1212
        %1214 = vmatmul.f32.gmra.mxu0 %v1175
        %v1215 = vpop.f32.mrf.mxu0
        %v1216 = vadd.f32 %v1146, %v1215
        %1217 = vmatmul.f32.gmra.mxu0 %v1178
        %v1218 = vpop.f32.mrf.mxu0
        %v1219 = vadd.f32 %v1150, %v1218
        %1220 = vmatmul.f32.gmra.mxu0 %v1181
        %v1221 = vpop.f32.mrf.mxu0
        %v1222 = vadd.f32 %v1154, %v1221
        %1223 = vdwg.mxu0
        %1224 = vmatpush.msra.mxu0 0.0
        %1225 = vmatpush.msra.mxu0 0.0
        %1226 = vmatpush.msra.mxu0 0.0
        %1227 = vmatpush.msra.mxu0 0.0
        %1228 = vmatpush.msra.mxu0 0.0
        %1229 = vmatpush.msra.mxu0 0.0
        %1230 = vmatpush.msra.mxu0 0.0
        %1231 = vmatpush.msra.mxu0 0.0
        %1232 = vmatpush.msra.mxu0 0.0
        %1233 = vmatpush.msra.mxu0 0.0
        %1234 = vmatpush.msra.mxu0 0.0
        %1235 = vmatpush.msra.mxu0 0.0
        %1236 = vmatpush.msra.mxu0 %v433
        %1237 = vmatpush.msra.mxu0 %v425
        %1238 = vmatpush.msra.mxu0 %v417
        %1239 = vmatpush.msra.mxu0 %v409
        %1240 = vmatmul.f32.gmra.mxu0 %v1160
        %v1241 = vpop.f32.mrf.mxu0
        %v1242 = vadd.f32 %v1127, %v1241
        %1243 = vmatmul.f32.gmra.mxu0 %v1163
        %v1244 = vpop.f32.mrf.mxu0
        %v1245 = vadd.f32 %v1131, %v1244
        %1246 = vmatmul.f32.gmra.mxu0 %v1166
        %v1247 = vpop.f32.mrf.mxu0
        %v1248 = vadd.f32 %v1135, %v1247
        %1249 = vmatmul.f32.gmra.mxu0 %v1169
        %v1250 = vpop.f32.mrf.mxu0
        %v1251 = vadd.f32 %v1139, %v1250
        %1252 = vmatmul.f32.gmra.mxu0 %v1172
        %v1253 = vpop.f32.mrf.mxu0
        %v1254 = vadd.f32 %v1143, %v1253
        %1255 = vmatmul.f32.gmra.mxu0 %v1175
        %v1256 = vpop.f32.mrf.mxu0
        %v1257 = vadd.f32 %v1147, %v1256
        %1258 = vmatmul.f32.gmra.mxu0 %v1178
        %v1259 = vpop.f32.mrf.mxu0
        %v1260 = vadd.f32 %v1151, %v1259
        %1261 = vmatmul.f32.gmra.mxu0 %v1181
        %v1262 = vpop.f32.mrf.mxu0
        %v1263 = vadd.f32 %v1155, %v1262
        %1264 = vdwg.mxu0
        %1265 = vmatpush.msra.mxu0 0.0
        %1266 = vmatpush.msra.mxu0 0.0
        %1267 = vmatpush.msra.mxu0 0.0
        %1268 = vmatpush.msra.mxu0 0.0
        %1269 = vmatpush.msra.mxu0 0.0
        %1270 = vmatpush.msra.mxu0 0.0
        %1271 = vmatpush.msra.mxu0 0.0
        %1272 = vmatpush.msra.mxu0 0.0
        %1273 = vmatpush.msra.mxu0 0.0
        %1274 = vmatpush.msra.mxu0 0.0
        %1275 = vmatpush.msra.mxu0 0.0
        %1276 = vmatpush.msra.mxu0 0.0
        %1277 = vmatpush.msra.mxu0 %v435
        %1278 = vmatpush.msra.mxu0 %v427
        %1279 = vmatpush.msra.mxu0 %v419
        %1280 = vmatpush.msra.mxu0 %v411
        %1281 = vmatmul.f32.gmra.mxu0 %v1160
        %v1282 = vpop.f32.mrf.mxu0
        %v1283 = vadd.f32 %v1128, %v1282
        %1284 = vmatmul.f32.gmra.mxu0 %v1163
        %v1285 = vpop.f32.mrf.mxu0
        %v1286 = vadd.f32 %v1132, %v1285
        %1287 = vmatmul.f32.gmra.mxu0 %v1166
        %v1288 = vpop.f32.mrf.mxu0
        %v1289 = vadd.f32 %v1136, %v1288
        %1290 = vmatmul.f32.gmra.mxu0 %v1169
        %v1291 = vpop.f32.mrf.mxu0
        %v1292 = vadd.f32 %v1140, %v1291
        %1293 = vmatmul.f32.gmra.mxu0 %v1172
        %v1294 = vpop.f32.mrf.mxu0
        %v1295 = vadd.f32 %v1144, %v1294
        %1296 = vmatmul.f32.gmra.mxu0 %v1175
        %v1297 = vpop.f32.mrf.mxu0
        %v1298 = vadd.f32 %v1148, %v1297
        %1299 = vmatmul.f32.gmra.mxu0 %v1178
        %v1300 = vpop.f32.mrf.mxu0
        %v1301 = vadd.f32 %v1152, %v1300
        %1302 = vmatmul.f32.gmra.mxu0 %v1181
        %v1303 = vpop.f32.mrf.mxu0
        %v1304 = vadd.f32 %v1156, %v1303
        %1305 = vdwg.mxu0
        %1306 = vmatpush.msra.mxu0 0.0
        %1307 = vmatpush.msra.mxu0 0.0
        %1308 = vmatpush.msra.mxu0 0.0
        %1309 = vmatpush.msra.mxu0 0.0
        %1310 = vmatpush.msra.mxu0 0.0
        %1311 = vmatpush.msra.mxu0 0.0
        %1312 = vmatpush.msra.mxu0 0.0
        %1313 = vmatpush.msra.mxu0 0.0
        %1314 = vmatpush.msra.mxu0 0.0
        %1315 = vmatpush.msra.mxu0 0.0
        %1316 = vmatpush.msra.mxu0 0.0
        %1317 = vmatpush.msra.mxu0 0.0
        %1318 = vmatpush.msra.mxu0 %v437
        %1319 = vmatpush.msra.mxu0 %v429
        %1320 = vmatpush.msra.mxu0 %v421
        %1321 = vmatpush.msra.mxu0 %v413
        %1322 = vmatmul.f32.gmra.mxu0 %v1160
        %v1323 = vpop.f32.mrf.mxu0
        %v1324 = vadd.f32 %v1129, %v1323
        %1325 = vmatmul.f32.gmra.mxu0 %v1163
        %v1326 = vpop.f32.mrf.mxu0
        %v1327 = vadd.f32 %v1133, %v1326
        %1328 = vmatmul.f32.gmra.mxu0 %v1166
        %v1329 = vpop.f32.mrf.mxu0
        %v1330 = vadd.f32 %v1137, %v1329
        %1331 = vmatmul.f32.gmra.mxu0 %v1169
        %v1332 = vpop.f32.mrf.mxu0
        %v1333 = vadd.f32 %v1141, %v1332
        %1334 = vmatmul.f32.gmra.mxu0 %v1172
        %v1335 = vpop.f32.mrf.mxu0
        %v1336 = vadd.f32 %v1145, %v1335
        %1337 = vmatmul.f32.gmra.mxu0 %v1175
        %v1338 = vpop.f32.mrf.mxu0
        %v1339 = vadd.f32 %v1149, %v1338
        %1340 = vmatmul.f32.gmra.mxu0 %v1178
        %v1341 = vpop.f32.mrf.mxu0
        %v1342 = vadd.f32 %v1153, %v1341
        %1343 = vmatmul.f32.gmra.mxu0 %v1181
        %v1344 = vpop.f32.mrf.mxu0
        %v1345 = vadd.f32 %v1157, %v1344
        %1346 = vdwg.mxu0
        %1347 = vset.pattern.permute.xlu0 1
        %1348 = vperm.xlu0 %1347, %v1056
        %v1349 = vpop.permute.xlu0 %1348
        %1351 = vset.pattern.permute.xlu0 1
        %1352 = vperm.xlu0 %1351, %v1057
        %v1353 = vpop.permute.xlu0 %1352
        %1355 = vset.pattern.permute.xlu0 1
        %1356 = vperm.xlu0 %1355, %v1058
        %v1357 = vpop.permute.xlu0 %1356
        %1359 = vset.pattern.permute.xlu0 1
        %1360 = vperm.xlu0 %1359, %v1059
        %v1361 = vpop.permute.xlu0 %1360
        %1363 = vset.pattern.permute.xlu0 1
        %1364 = vperm.xlu0 %1363, %v1060
        %v1365 = vpop.permute.xlu0 %1364
        %1367 = vset.pattern.permute.xlu0 1
        %1368 = vperm.xlu0 %1367, %v1061
        %v1369 = vpop.permute.xlu0 %1368
        %1371 = vset.pattern.permute.xlu0 1
        %1372 = vperm.xlu0 %1371, %v1062
        %v1373 = vpop.permute.xlu0 %1372
        %1375 = vset.pattern.permute.xlu0 1
        %1376 = vperm.xlu0 %1375, %v1063
        %v1377 = vpop.permute.xlu0 %1376
        %v1381 = vperm.slane %v901, 2
        %v1382 = vperm.slane %v901, 6
        %v1383 = vperm.slane %v1055, 2
        %v1384 = vperm.slane %v1055, 6
        %v1389 = vperm.slane %v1381, 2
        %v1390 = vperm.slane %v1382, 2
        %v1391 = vperm.slane %v1383, 2
        %v1392 = vperm.slane %v1384, 2
        %v1393 = vmul.f32 %v1349, %v1389
        %v1394 = vmul.f32 %v1349, %v1390
        %v1395 = vmul.f32 %v1349, %v1391
        %v1396 = vmul.f32 %v1349, %v1392
        %v1397 = vmul.f32 %v1353, %v1389
        %v1398 = vmul.f32 %v1353, %v1390
        %v1399 = vmul.f32 %v1353, %v1391
        %v1400 = vmul.f32 %v1353, %v1392
        %v1401 = vmul.f32 %v1357, %v1389
        %v1402 = vmul.f32 %v1357, %v1390
        %v1403 = vmul.f32 %v1357, %v1391
        %v1404 = vmul.f32 %v1357, %v1392
        %v1405 = vmul.f32 %v1361, %v1389
        %v1406 = vmul.f32 %v1361, %v1390
        %v1407 = vmul.f32 %v1361, %v1391
        %v1408 = vmul.f32 %v1361, %v1392
        %v1409 = vmul.f32 %v1365, %v1389
        %v1410 = vmul.f32 %v1365, %v1390
        %v1411 = vmul.f32 %v1365, %v1391
        %v1412 = vmul.f32 %v1365, %v1392
        %v1413 = vmul.f32 %v1369, %v1389
        %v1414 = vmul.f32 %v1369, %v1390
        %v1415 = vmul.f32 %v1369, %v1391
        %v1416 = vmul.f32 %v1369, %v1392
        %v1417 = vmul.f32 %v1373, %v1389
        %v1418 = vmul.f32 %v1373, %v1390
        %v1419 = vmul.f32 %v1373, %v1391
        %v1420 = vmul.f32 %v1373, %v1392
        %v1421 = vmul.f32 %v1377, %v1389
        %v1422 = vmul.f32 %v1377, %v1390
        %v1423 = vmul.f32 %v1377, %v1391
        %v1424 = vmul.f32 %v1377, %v1392
        %v1425 = vadd.f32 %v1201, %v1393
        %v1426 = vadd.f32 %v1242, %v1394
        %v1427 = vadd.f32 %v1283, %v1395
        %v1428 = vadd.f32 %v1324, %v1396
        %v1429 = vadd.f32 %v1204, %v1397
        %v1430 = vadd.f32 %v1245, %v1398
        %v1431 = vadd.f32 %v1286, %v1399
        %v1432 = vadd.f32 %v1327, %v1400
        %v1433 = vadd.f32 %v1207, %v1401
        %v1434 = vadd.f32 %v1248, %v1402
        %v1435 = vadd.f32 %v1289, %v1403
        %v1436 = vadd.f32 %v1330, %v1404
        %v1437 = vadd.f32 %v1210, %v1405
        %v1438 = vadd.f32 %v1251, %v1406
        %v1439 = vadd.f32 %v1292, %v1407
        %v1440 = vadd.f32 %v1333, %v1408
        %v1441 = vadd.f32 %v1213, %v1409
        %v1442 = vadd.f32 %v1254, %v1410
        %v1443 = vadd.f32 %v1295, %v1411
        %v1444 = vadd.f32 %v1336, %v1412
        %v1445 = vadd.f32 %v1216, %v1413
        %v1446 = vadd.f32 %v1257, %v1414
        %v1447 = vadd.f32 %v1298, %v1415
        %v1448 = vadd.f32 %v1339, %v1416
        %v1449 = vadd.f32 %v1219, %v1417
        %v1450 = vadd.f32 %v1260, %v1418
        %v1451 = vadd.f32 %v1301, %v1419
        %v1452 = vadd.f32 %v1342, %v1420
        %v1453 = vadd.f32 %v1222, %v1421
        %v1454 = vadd.f32 %v1263, %v1422
        %v1455 = vadd.f32 %v1304, %v1423
        %v1456 = vadd.f32 %v1345, %v1424
        %1457 = vset.pattern.permute.xlu0 2
        %1458 = vperm.xlu0 %1457, %v1056
        %v1459 = vpop.permute.xlu0 %1458
        %1461 = vset.pattern.permute.xlu0 2
        %1462 = vperm.xlu0 %1461, %v1057
        %v1463 = vpop.permute.xlu0 %1462
        %1465 = vset.pattern.permute.xlu0 2
        %1466 = vperm.xlu0 %1465, %v1058
        %v1467 = vpop.permute.xlu0 %1466
        %1469 = vset.pattern.permute.xlu0 2
        %1470 = vperm.xlu0 %1469, %v1059
        %v1471 = vpop.permute.xlu0 %1470
        %1473 = vset.pattern.permute.xlu0 2
        %1474 = vperm.xlu0 %1473, %v1060
        %v1475 = vpop.permute.xlu0 %1474
        %1477 = vset.pattern.permute.xlu0 2
        %1478 = vperm.xlu0 %1477, %v1061
        %v1479 = vpop.permute.xlu0 %1478
        %1481 = vset.pattern.permute.xlu0 2
        %1482 = vperm.xlu0 %1481, %v1062
        %v1483 = vpop.permute.xlu0 %1482
        %1485 = vset.pattern.permute.xlu0 2
        %1486 = vperm.xlu0 %1485, %v1063
        %v1487 = vpop.permute.xlu0 %1486
        %v1489 = vadd.f32 %v1425, %v1459
        %v1490 = vadd.f32 %v1426, %v1459
        %v1491 = vadd.f32 %v1427, %v1459
        %v1492 = vadd.f32 %v1428, %v1459
        %v1493 = vadd.f32 %v1429, %v1463
        %v1494 = vadd.f32 %v1430, %v1463
        %v1495 = vadd.f32 %v1431, %v1463
        %v1496 = vadd.f32 %v1432, %v1463
        %v1497 = vadd.f32 %v1433, %v1467
        %v1498 = vadd.f32 %v1434, %v1467
        %v1499 = vadd.f32 %v1435, %v1467
        %v1500 = vadd.f32 %v1436, %v1467
        %v1501 = vadd.f32 %v1437, %v1471
        %v1502 = vadd.f32 %v1438, %v1471
        %v1503 = vadd.f32 %v1439, %v1471
        %v1504 = vadd.f32 %v1440, %v1471
        %v1505 = vadd.f32 %v1441, %v1475
        %v1506 = vadd.f32 %v1442, %v1475
        %v1507 = vadd.f32 %v1443, %v1475
        %v1508 = vadd.f32 %v1444, %v1475
        %v1509 = vadd.f32 %v1445, %v1479
        %v1510 = vadd.f32 %v1446, %v1479
        %v1511 = vadd.f32 %v1447, %v1479
        %v1512 = vadd.f32 %v1448, %v1479
        %v1513 = vadd.f32 %v1449, %v1483
        %v1514 = vadd.f32 %v1450, %v1483
        %v1515 = vadd.f32 %v1451, %v1483
        %v1516 = vadd.f32 %v1452, %v1483
        %v1517 = vadd.f32 %v1453, %v1487
        %v1518 = vadd.f32 %v1454, %v1487
        %v1519 = vadd.f32 %v1455, %v1487
        %v1520 = vadd.f32 %v1456, %v1487
        %v1521 = vxor.u32 %v1489, 2147483648
        %v1522 = vxor.u32 %v1490, 2147483648
        %v1523 = vxor.u32 %v1491, 2147483648
        %v1524 = vxor.u32 %v1492, 2147483648
        %v1525 = vxor.u32 %v1493, 2147483648
        %v1526 = vxor.u32 %v1494, 2147483648
        %v1527 = vxor.u32 %v1495, 2147483648
        %v1528 = vxor.u32 %v1496, 2147483648
        %v1529 = vxor.u32 %v1497, 2147483648
        %v1530 = vxor.u32 %v1498, 2147483648
        %v1531 = vxor.u32 %v1499, 2147483648
        %v1532 = vxor.u32 %v1500, 2147483648
        %v1533 = vxor.u32 %v1501, 2147483648
        %v1534 = vxor.u32 %v1502, 2147483648
        %v1535 = vxor.u32 %v1503, 2147483648
        %v1536 = vxor.u32 %v1504, 2147483648
        %v1537 = vxor.u32 %v1505, 2147483648
        %v1538 = vxor.u32 %v1506, 2147483648
        %v1539 = vxor.u32 %v1507, 2147483648
        %v1540 = vxor.u32 %v1508, 2147483648
        %v1541 = vxor.u32 %v1509, 2147483648
        %v1542 = vxor.u32 %v1510, 2147483648
        %v1543 = vxor.u32 %v1511, 2147483648
        %v1544 = vxor.u32 %v1512, 2147483648
        %v1545 = vxor.u32 %v1513, 2147483648
        %v1546 = vxor.u32 %v1514, 2147483648
        %v1547 = vxor.u32 %v1515, 2147483648
        %v1548 = vxor.u32 %v1516, 2147483648
        %v1549 = vxor.u32 %v1517, 2147483648
        %v1550 = vxor.u32 %v1518, 2147483648
        %v1551 = vxor.u32 %v1519, 2147483648
        %v1552 = vxor.u32 %v1520, 2147483648
        %v1553 = vmul.f32 %v1521, 1.442695
        %v1554 = vpow.pop %v1553
        %v1555 = vmul.f32 %v1522, 1.442695
        %v1556 = vpow.pop %v1555
        %v1557 = vmul.f32 %v1523, 1.442695
        %v1558 = vpow.pop %v1557
        %v1559 = vmul.f32 %v1524, 1.442695
        %v1560 = vpow.pop %v1559
        %v1561 = vmul.f32 %v1525, 1.442695
        %v1562 = vpow.pop %v1561
        %v1563 = vmul.f32 %v1526, 1.442695
        %v1564 = vpow.pop %v1563
        %v1565 = vmul.f32 %v1527, 1.442695
        %v1566 = vpow.pop %v1565
        %v1567 = vmul.f32 %v1528, 1.442695
        %v1568 = vpow.pop %v1567
        %v1569 = vmul.f32 %v1529, 1.442695
        %v1570 = vpow.pop %v1569
        %v1571 = vmul.f32 %v1530, 1.442695
        %v1572 = vpow.pop %v1571
        %v1573 = vmul.f32 %v1531, 1.442695
        %v1574 = vpow.pop %v1573
        %v1575 = vmul.f32 %v1532, 1.442695
        %v1576 = vpow.pop %v1575
        %v1577 = vmul.f32 %v1533, 1.442695
        %v1578 = vpow.pop %v1577
        %v1579 = vmul.f32 %v1534, 1.442695
        %v1580 = vpow.pop %v1579
        %v1581 = vmul.f32 %v1535, 1.442695
        %v1582 = vpow.pop %v1581
        %v1583 = vmul.f32 %v1536, 1.442695
        %v1584 = vpow.pop %v1583
        %v1585 = vmul.f32 %v1537, 1.442695
        %v1586 = vpow.pop %v1585
        %v1587 = vmul.f32 %v1538, 1.442695
        %v1588 = vpow.pop %v1587
        %v1589 = vmul.f32 %v1539, 1.442695
        %v1590 = vpow.pop %v1589
        %v1591 = vmul.f32 %v1540, 1.442695
        %v1592 = vpow.pop %v1591
        %v1593 = vmul.f32 %v1541, 1.442695
        %v1594 = vpow.pop %v1593
        %v1595 = vmul.f32 %v1542, 1.442695
        %v1596 = vpow.pop %v1595
        %v1597 = vmul.f32 %v1543, 1.442695
        %v1598 = vpow.pop %v1597
        %v1599 = vmul.f32 %v1544, 1.442695
        %v1600 = vpow.pop %v1599
        %v1601 = vmul.f32 %v1545, 1.442695
        %v1602 = vpow.pop %v1601
        %v1603 = vmul.f32 %v1546, 1.442695
        %v1604 = vpow.pop %v1603
        %v1605 = vmul.f32 %v1547, 1.442695
        %v1606 = vpow.pop %v1605
        %v1607 = vmul.f32 %v1548, 1.442695
        %v1608 = vpow.pop %v1607
        %v1609 = vmul.f32 %v1549, 1.442695
        %v1610 = vpow.pop %v1609
        %v1611 = vmul.f32 %v1550, 1.442695
        %v1612 = vpow.pop %v1611
        %v1613 = vmul.f32 %v1551, 1.442695
        %v1614 = vpow.pop %v1613
        %v1615 = vmul.f32 %v1552, 1.442695
        %v1616 = vpow.pop %v1615
        %v1617 = vadd.f32 %v1554, 1.0
        %v1618 = vadd.f32 %v1556, 1.0
        %v1619 = vadd.f32 %v1558, 1.0
        %v1620 = vadd.f32 %v1560, 1.0
        %v1621 = vadd.f32 %v1562, 1.0
        %v1622 = vadd.f32 %v1564, 1.0
        %v1623 = vadd.f32 %v1566, 1.0
        %v1624 = vadd.f32 %v1568, 1.0
        %v1625 = vadd.f32 %v1570, 1.0
        %v1626 = vadd.f32 %v1572, 1.0
        %v1627 = vadd.f32 %v1574, 1.0
        %v1628 = vadd.f32 %v1576, 1.0
        %v1629 = vadd.f32 %v1578, 1.0
        %v1630 = vadd.f32 %v1580, 1.0
        %v1631 = vadd.f32 %v1582, 1.0
        %v1632 = vadd.f32 %v1584, 1.0
        %v1633 = vadd.f32 %v1586, 1.0
        %v1634 = vadd.f32 %v1588, 1.0
        %v1635 = vadd.f32 %v1590, 1.0
        %v1636 = vadd.f32 %v1592, 1.0
        %v1637 = vadd.f32 %v1594, 1.0
        %v1638 = vadd.f32 %v1596, 1.0
        %v1639 = vadd.f32 %v1598, 1.0
        %v1640 = vadd.f32 %v1600, 1.0
        %v1641 = vadd.f32 %v1602, 1.0
        %v1642 = vadd.f32 %v1604, 1.0
        %v1643 = vadd.f32 %v1606, 1.0
        %v1644 = vadd.f32 %v1608, 1.0
        %v1645 = vadd.f32 %v1610, 1.0
        %v1646 = vadd.f32 %v1612, 1.0
        %v1647 = vadd.f32 %v1614, 1.0
        %v1648 = vadd.f32 %v1616, 1.0
        %v1649 = vrcp.pop %v1617
        %v1650 = vmul.f32 %v1617, %v1649
        %v1651 = vsub.f32 1.0, %v1650
        %v1652 = vmul.f32 %v1649, %v1651
        %v1653 = vadd.f32 %v1649, %v1652
        %vm1654 = vweird.f32 %v1617
        %vm1655 = vweird.f32 %v1649
        %vm1656 = vmor %vm1654, %vm1655
        %v1657 = vsel %vm1656, %v1649, %v1653
        %v1658 = vand.u32 2147483647, %v1617
        %vm1659 = vcmp.eq.f32.partialorder %v1658, 8.507059e+37
        %v1660 = vand.u32 %v1617, 2147483648
        %v1661 = vor.u32 1.1754944e-38, %v1660
        %v1662 = vsel %vm1659, %v1661, %v1657
        %v1663 = vmul.f32 1.0, %v1662
        %v1664 = vrcp.pop %v1618
        %v1665 = vmul.f32 %v1618, %v1664
        %v1666 = vsub.f32 1.0, %v1665
        %v1667 = vmul.f32 %v1664, %v1666
        %v1668 = vadd.f32 %v1664, %v1667
        %vm1669 = vweird.f32 %v1618
        %vm1670 = vweird.f32 %v1664
        %vm1671 = vmor %vm1669, %vm1670
        %v1672 = vsel %vm1671, %v1664, %v1668
        %v1673 = vand.u32 2147483647, %v1618
        %vm1674 = vcmp.eq.f32.partialorder %v1673, 8.507059e+37
        %v1675 = vand.u32 %v1618, 2147483648
        %v1676 = vor.u32 1.1754944e-38, %v1675
        %v1677 = vsel %vm1674, %v1676, %v1672
        %v1678 = vmul.f32 1.0, %v1677
        %v1679 = vrcp.pop %v1619
        %v1680 = vmul.f32 %v1619, %v1679
        %v1681 = vsub.f32 1.0, %v1680
        %v1682 = vmul.f32 %v1679, %v1681
        %v1683 = vadd.f32 %v1679, %v1682
        %vm1684 = vweird.f32 %v1619
        %vm1685 = vweird.f32 %v1679
        %vm1686 = vmor %vm1684, %vm1685
        %v1687 = vsel %vm1686, %v1679, %v1683
        %v1688 = vand.u32 2147483647, %v1619
        %vm1689 = vcmp.eq.f32.partialorder %v1688, 8.507059e+37
        %v1690 = vand.u32 %v1619, 2147483648
        %v1691 = vor.u32 1.1754944e-38, %v1690
        %v1692 = vsel %vm1689, %v1691, %v1687
        %v1693 = vmul.f32 1.0, %v1692
        %v1694 = vrcp.pop %v1620
        %v1695 = vmul.f32 %v1620, %v1694
        %v1696 = vsub.f32 1.0, %v1695
        %v1697 = vmul.f32 %v1694, %v1696
        %v1698 = vadd.f32 %v1694, %v1697
        %vm1699 = vweird.f32 %v1620
        %vm1700 = vweird.f32 %v1694
        %vm1701 = vmor %vm1699, %vm1700
        %v1702 = vsel %vm1701, %v1694, %v1698
        %v1703 = vand.u32 2147483647, %v1620
        %vm1704 = vcmp.eq.f32.partialorder %v1703, 8.507059e+37
        %v1705 = vand.u32 %v1620, 2147483648
        %v1706 = vor.u32 1.1754944e-38, %v1705
        %v1707 = vsel %vm1704, %v1706, %v1702
        %v1708 = vmul.f32 1.0, %v1707
        %v1709 = vrcp.pop %v1621
        %v1710 = vmul.f32 %v1621, %v1709
        %v1711 = vsub.f32 1.0, %v1710
        %v1712 = vmul.f32 %v1709, %v1711
        %v1713 = vadd.f32 %v1709, %v1712
        %vm1714 = vweird.f32 %v1621
        %vm1715 = vweird.f32 %v1709
        %vm1716 = vmor %vm1714, %vm1715
        %v1717 = vsel %vm1716, %v1709, %v1713
        %v1718 = vand.u32 2147483647, %v1621
        %vm1719 = vcmp.eq.f32.partialorder %v1718, 8.507059e+37
        %v1720 = vand.u32 %v1621, 2147483648
        %v1721 = vor.u32 1.1754944e-38, %v1720
        %v1722 = vsel %vm1719, %v1721, %v1717
        %v1723 = vmul.f32 1.0, %v1722
        %v1724 = vrcp.pop %v1622
        %v1725 = vmul.f32 %v1622, %v1724
        %v1726 = vsub.f32 1.0, %v1725
        %v1727 = vmul.f32 %v1724, %v1726
        %v1728 = vadd.f32 %v1724, %v1727
        %vm1729 = vweird.f32 %v1622
        %vm1730 = vweird.f32 %v1724
        %vm1731 = vmor %vm1729, %vm1730
        %v1732 = vsel %vm1731, %v1724, %v1728
        %v1733 = vand.u32 2147483647, %v1622
        %vm1734 = vcmp.eq.f32.partialorder %v1733, 8.507059e+37
        %v1735 = vand.u32 %v1622, 2147483648
        %v1736 = vor.u32 1.1754944e-38, %v1735
        %v1737 = vsel %vm1734, %v1736, %v1732
        %v1738 = vmul.f32 1.0, %v1737
        %v1739 = vrcp.pop %v1623
        %v1740 = vmul.f32 %v1623, %v1739
        %v1741 = vsub.f32 1.0, %v1740
        %v1742 = vmul.f32 %v1739, %v1741
        %v1743 = vadd.f32 %v1739, %v1742
        %vm1744 = vweird.f32 %v1623
        %vm1745 = vweird.f32 %v1739
        %vm1746 = vmor %vm1744, %vm1745
        %v1747 = vsel %vm1746, %v1739, %v1743
        %v1748 = vand.u32 2147483647, %v1623
        %vm1749 = vcmp.eq.f32.partialorder %v1748, 8.507059e+37
        %v1750 = vand.u32 %v1623, 2147483648
        %v1751 = vor.u32 1.1754944e-38, %v1750
        %v1752 = vsel %vm1749, %v1751, %v1747
        %v1753 = vmul.f32 1.0, %v1752
        %v1754 = vrcp.pop %v1624
        %v1755 = vmul.f32 %v1624, %v1754
        %v1756 = vsub.f32 1.0, %v1755
        %v1757 = vmul.f32 %v1754, %v1756
        %v1758 = vadd.f32 %v1754, %v1757
        %vm1759 = vweird.f32 %v1624
        %vm1760 = vweird.f32 %v1754
        %vm1761 = vmor %vm1759, %vm1760
        %v1762 = vsel %vm1761, %v1754, %v1758
        %v1763 = vand.u32 2147483647, %v1624
        %vm1764 = vcmp.eq.f32.partialorder %v1763, 8.507059e+37
        %v1765 = vand.u32 %v1624, 2147483648
        %v1766 = vor.u32 1.1754944e-38, %v1765
        %v1767 = vsel %vm1764, %v1766, %v1762
        %v1768 = vmul.f32 1.0, %v1767
        %v1769 = vrcp.pop %v1625
        %v1770 = vmul.f32 %v1625, %v1769
        %v1771 = vsub.f32 1.0, %v1770
        %v1772 = vmul.f32 %v1769, %v1771
        %v1773 = vadd.f32 %v1769, %v1772
        %vm1774 = vweird.f32 %v1625
        %vm1775 = vweird.f32 %v1769
        %vm1776 = vmor %vm1774, %vm1775
        %v1777 = vsel %vm1776, %v1769, %v1773
        %v1778 = vand.u32 2147483647, %v1625
        %vm1779 = vcmp.eq.f32.partialorder %v1778, 8.507059e+37
        %v1780 = vand.u32 %v1625, 2147483648
        %v1781 = vor.u32 1.1754944e-38, %v1780
        %v1782 = vsel %vm1779, %v1781, %v1777
        %v1783 = vmul.f32 1.0, %v1782
        %v1784 = vrcp.pop %v1626
        %v1785 = vmul.f32 %v1626, %v1784
        %v1786 = vsub.f32 1.0, %v1785
        %v1787 = vmul.f32 %v1784, %v1786
        %v1788 = vadd.f32 %v1784, %v1787
        %vm1789 = vweird.f32 %v1626
        %vm1790 = vweird.f32 %v1784
        %vm1791 = vmor %vm1789, %vm1790
        %v1792 = vsel %vm1791, %v1784, %v1788
        %v1793 = vand.u32 2147483647, %v1626
        %vm1794 = vcmp.eq.f32.partialorder %v1793, 8.507059e+37
        %v1795 = vand.u32 %v1626, 2147483648
        %v1796 = vor.u32 1.1754944e-38, %v1795
        %v1797 = vsel %vm1794, %v1796, %v1792
        %v1798 = vmul.f32 1.0, %v1797
        %v1799 = vrcp.pop %v1627
        %v1800 = vmul.f32 %v1627, %v1799
        %v1801 = vsub.f32 1.0, %v1800
        %v1802 = vmul.f32 %v1799, %v1801
        %v1803 = vadd.f32 %v1799, %v1802
        %vm1804 = vweird.f32 %v1627
        %vm1805 = vweird.f32 %v1799
        %vm1806 = vmor %vm1804, %vm1805
        %v1807 = vsel %vm1806, %v1799, %v1803
        %v1808 = vand.u32 2147483647, %v1627
        %vm1809 = vcmp.eq.f32.partialorder %v1808, 8.507059e+37
        %v1810 = vand.u32 %v1627, 2147483648
        %v1811 = vor.u32 1.1754944e-38, %v1810
        %v1812 = vsel %vm1809, %v1811, %v1807
        %v1813 = vmul.f32 1.0, %v1812
        %v1814 = vrcp.pop %v1628
        %v1815 = vmul.f32 %v1628, %v1814
        %v1816 = vsub.f32 1.0, %v1815
        %v1817 = vmul.f32 %v1814, %v1816
        %v1818 = vadd.f32 %v1814, %v1817
        %vm1819 = vweird.f32 %v1628
        %vm1820 = vweird.f32 %v1814
        %vm1821 = vmor %vm1819, %vm1820
        %v1822 = vsel %vm1821, %v1814, %v1818
        %v1823 = vand.u32 2147483647, %v1628
        %vm1824 = vcmp.eq.f32.partialorder %v1823, 8.507059e+37
        %v1825 = vand.u32 %v1628, 2147483648
        %v1826 = vor.u32 1.1754944e-38, %v1825
        %v1827 = vsel %vm1824, %v1826, %v1822
        %v1828 = vmul.f32 1.0, %v1827
        %v1829 = vrcp.pop %v1629
        %v1830 = vmul.f32 %v1629, %v1829
        %v1831 = vsub.f32 1.0, %v1830
        %v1832 = vmul.f32 %v1829, %v1831
        %v1833 = vadd.f32 %v1829, %v1832
        %vm1834 = vweird.f32 %v1629
        %vm1835 = vweird.f32 %v1829
        %vm1836 = vmor %vm1834, %vm1835
        %v1837 = vsel %vm1836, %v1829, %v1833
        %v1838 = vand.u32 2147483647, %v1629
        %vm1839 = vcmp.eq.f32.partialorder %v1838, 8.507059e+37
        %v1840 = vand.u32 %v1629, 2147483648
        %v1841 = vor.u32 1.1754944e-38, %v1840
        %v1842 = vsel %vm1839, %v1841, %v1837
        %v1843 = vmul.f32 1.0, %v1842
        %v1844 = vrcp.pop %v1630
        %v1845 = vmul.f32 %v1630, %v1844
        %v1846 = vsub.f32 1.0, %v1845
        %v1847 = vmul.f32 %v1844, %v1846
        %v1848 = vadd.f32 %v1844, %v1847
        %vm1849 = vweird.f32 %v1630
        %vm1850 = vweird.f32 %v1844
        %vm1851 = vmor %vm1849, %vm1850
        %v1852 = vsel %vm1851, %v1844, %v1848
        %v1853 = vand.u32 2147483647, %v1630
        %vm1854 = vcmp.eq.f32.partialorder %v1853, 8.507059e+37
        %v1855 = vand.u32 %v1630, 2147483648
        %v1856 = vor.u32 1.1754944e-38, %v1855
        %v1857 = vsel %vm1854, %v1856, %v1852
        %v1858 = vmul.f32 1.0, %v1857
        %v1859 = vrcp.pop %v1631
        %v1860 = vmul.f32 %v1631, %v1859
        %v1861 = vsub.f32 1.0, %v1860
        %v1862 = vmul.f32 %v1859, %v1861
        %v1863 = vadd.f32 %v1859, %v1862
        %vm1864 = vweird.f32 %v1631
        %vm1865 = vweird.f32 %v1859
        %vm1866 = vmor %vm1864, %vm1865
        %v1867 = vsel %vm1866, %v1859, %v1863
        %v1868 = vand.u32 2147483647, %v1631
        %vm1869 = vcmp.eq.f32.partialorder %v1868, 8.507059e+37
        %v1870 = vand.u32 %v1631, 2147483648
        %v1871 = vor.u32 1.1754944e-38, %v1870
        %v1872 = vsel %vm1869, %v1871, %v1867
        %v1873 = vmul.f32 1.0, %v1872
        %v1874 = vrcp.pop %v1632
        %v1875 = vmul.f32 %v1632, %v1874
        %v1876 = vsub.f32 1.0, %v1875
        %v1877 = vmul.f32 %v1874, %v1876
        %v1878 = vadd.f32 %v1874, %v1877
        %vm1879 = vweird.f32 %v1632
        %vm1880 = vweird.f32 %v1874
        %vm1881 = vmor %vm1879, %vm1880
        %v1882 = vsel %vm1881, %v1874, %v1878
        %v1883 = vand.u32 2147483647, %v1632
        %vm1884 = vcmp.eq.f32.partialorder %v1883, 8.507059e+37
        %v1885 = vand.u32 %v1632, 2147483648
        %v1886 = vor.u32 1.1754944e-38, %v1885
        %v1887 = vsel %vm1884, %v1886, %v1882
        %v1888 = vmul.f32 1.0, %v1887
        %v1889 = vrcp.pop %v1633
        %v1890 = vmul.f32 %v1633, %v1889
        %v1891 = vsub.f32 1.0, %v1890
        %v1892 = vmul.f32 %v1889, %v1891
        %v1893 = vadd.f32 %v1889, %v1892
        %vm1894 = vweird.f32 %v1633
        %vm1895 = vweird.f32 %v1889
        %vm1896 = vmor %vm1894, %vm1895
        %v1897 = vsel %vm1896, %v1889, %v1893
        %v1898 = vand.u32 2147483647, %v1633
        %vm1899 = vcmp.eq.f32.partialorder %v1898, 8.507059e+37
        %v1900 = vand.u32 %v1633, 2147483648
        %v1901 = vor.u32 1.1754944e-38, %v1900
        %v1902 = vsel %vm1899, %v1901, %v1897
        %v1903 = vmul.f32 1.0, %v1902
        %v1904 = vrcp.pop %v1634
        %v1905 = vmul.f32 %v1634, %v1904
        %v1906 = vsub.f32 1.0, %v1905
        %v1907 = vmul.f32 %v1904, %v1906
        %v1908 = vadd.f32 %v1904, %v1907
        %vm1909 = vweird.f32 %v1634
        %vm1910 = vweird.f32 %v1904
        %vm1911 = vmor %vm1909, %vm1910
        %v1912 = vsel %vm1911, %v1904, %v1908
        %v1913 = vand.u32 2147483647, %v1634
        %vm1914 = vcmp.eq.f32.partialorder %v1913, 8.507059e+37
        %v1915 = vand.u32 %v1634, 2147483648
        %v1916 = vor.u32 1.1754944e-38, %v1915
        %v1917 = vsel %vm1914, %v1916, %v1912
        %v1918 = vmul.f32 1.0, %v1917
        %v1919 = vrcp.pop %v1635
        %v1920 = vmul.f32 %v1635, %v1919
        %v1921 = vsub.f32 1.0, %v1920
        %v1922 = vmul.f32 %v1919, %v1921
        %v1923 = vadd.f32 %v1919, %v1922
        %vm1924 = vweird.f32 %v1635
        %vm1925 = vweird.f32 %v1919
        %vm1926 = vmor %vm1924, %vm1925
        %v1927 = vsel %vm1926, %v1919, %v1923
        %v1928 = vand.u32 2147483647, %v1635
        %vm1929 = vcmp.eq.f32.partialorder %v1928, 8.507059e+37
        %v1930 = vand.u32 %v1635, 2147483648
        %v1931 = vor.u32 1.1754944e-38, %v1930
        %v1932 = vsel %vm1929, %v1931, %v1927
        %v1933 = vmul.f32 1.0, %v1932
        %v1934 = vrcp.pop %v1636
        %v1935 = vmul.f32 %v1636, %v1934
        %v1936 = vsub.f32 1.0, %v1935
        %v1937 = vmul.f32 %v1934, %v1936
        %v1938 = vadd.f32 %v1934, %v1937
        %vm1939 = vweird.f32 %v1636
        %vm1940 = vweird.f32 %v1934
        %vm1941 = vmor %vm1939, %vm1940
        %v1942 = vsel %vm1941, %v1934, %v1938
        %v1943 = vand.u32 2147483647, %v1636
        %vm1944 = vcmp.eq.f32.partialorder %v1943, 8.507059e+37
        %v1945 = vand.u32 %v1636, 2147483648
        %v1946 = vor.u32 1.1754944e-38, %v1945
        %v1947 = vsel %vm1944, %v1946, %v1942
        %v1948 = vmul.f32 1.0, %v1947
        %v1949 = vrcp.pop %v1637
        %v1950 = vmul.f32 %v1637, %v1949
        %v1951 = vsub.f32 1.0, %v1950
        %v1952 = vmul.f32 %v1949, %v1951
        %v1953 = vadd.f32 %v1949, %v1952
        %vm1954 = vweird.f32 %v1637
        %vm1955 = vweird.f32 %v1949
        %vm1956 = vmor %vm1954, %vm1955
        %v1957 = vsel %vm1956, %v1949, %v1953
        %v1958 = vand.u32 2147483647, %v1637
        %vm1959 = vcmp.eq.f32.partialorder %v1958, 8.507059e+37
        %v1960 = vand.u32 %v1637, 2147483648
        %v1961 = vor.u32 1.1754944e-38, %v1960
        %v1962 = vsel %vm1959, %v1961, %v1957
        %v1963 = vmul.f32 1.0, %v1962
        %v1964 = vrcp.pop %v1638
        %v1965 = vmul.f32 %v1638, %v1964
        %v1966 = vsub.f32 1.0, %v1965
        %v1967 = vmul.f32 %v1964, %v1966
        %v1968 = vadd.f32 %v1964, %v1967
        %vm1969 = vweird.f32 %v1638
        %vm1970 = vweird.f32 %v1964
        %vm1971 = vmor %vm1969, %vm1970
        %v1972 = vsel %vm1971, %v1964, %v1968
        %v1973 = vand.u32 2147483647, %v1638
        %vm1974 = vcmp.eq.f32.partialorder %v1973, 8.507059e+37
        %v1975 = vand.u32 %v1638, 2147483648
        %v1976 = vor.u32 1.1754944e-38, %v1975
        %v1977 = vsel %vm1974, %v1976, %v1972
        %v1978 = vmul.f32 1.0, %v1977
        %v1979 = vrcp.pop %v1639
        %v1980 = vmul.f32 %v1639, %v1979
        %v1981 = vsub.f32 1.0, %v1980
        %v1982 = vmul.f32 %v1979, %v1981
        %v1983 = vadd.f32 %v1979, %v1982
        %vm1984 = vweird.f32 %v1639
        %vm1985 = vweird.f32 %v1979
        %vm1986 = vmor %vm1984, %vm1985
        %v1987 = vsel %vm1986, %v1979, %v1983
        %v1988 = vand.u32 2147483647, %v1639
        %vm1989 = vcmp.eq.f32.partialorder %v1988, 8.507059e+37
        %v1990 = vand.u32 %v1639, 2147483648
        %v1991 = vor.u32 1.1754944e-38, %v1990
        %v1992 = vsel %vm1989, %v1991, %v1987
        %v1993 = vmul.f32 1.0, %v1992
        %v1994 = vrcp.pop %v1640
        %v1995 = vmul.f32 %v1640, %v1994
        %v1996 = vsub.f32 1.0, %v1995
        %v1997 = vmul.f32 %v1994, %v1996
        %v1998 = vadd.f32 %v1994, %v1997
        %vm1999 = vweird.f32 %v1640
        %vm2000 = vweird.f32 %v1994
        %vm2001 = vmor %vm1999, %vm2000
        %v2002 = vsel %vm2001, %v1994, %v1998
        %v2003 = vand.u32 2147483647, %v1640
        %vm2004 = vcmp.eq.f32.partialorder %v2003, 8.507059e+37
        %v2005 = vand.u32 %v1640, 2147483648
        %v2006 = vor.u32 1.1754944e-38, %v2005
        %v2007 = vsel %vm2004, %v2006, %v2002
        %v2008 = vmul.f32 1.0, %v2007
        %v2009 = vrcp.pop %v1641
        %v2010 = vmul.f32 %v1641, %v2009
        %v2011 = vsub.f32 1.0, %v2010
        %v2012 = vmul.f32 %v2009, %v2011
        %v2013 = vadd.f32 %v2009, %v2012
        %vm2014 = vweird.f32 %v1641
        %vm2015 = vweird.f32 %v2009
        %vm2016 = vmor %vm2014, %vm2015
        %v2017 = vsel %vm2016, %v2009, %v2013
        %v2018 = vand.u32 2147483647, %v1641
        %vm2019 = vcmp.eq.f32.partialorder %v2018, 8.507059e+37
        %v2020 = vand.u32 %v1641, 2147483648
        %v2021 = vor.u32 1.1754944e-38, %v2020
        %v2022 = vsel %vm2019, %v2021, %v2017
        %v2023 = vmul.f32 1.0, %v2022
        %v2024 = vrcp.pop %v1642
        %v2025 = vmul.f32 %v1642, %v2024
        %v2026 = vsub.f32 1.0, %v2025
        %v2027 = vmul.f32 %v2024, %v2026
        %v2028 = vadd.f32 %v2024, %v2027
        %vm2029 = vweird.f32 %v1642
        %vm2030 = vweird.f32 %v2024
        %vm2031 = vmor %vm2029, %vm2030
        %v2032 = vsel %vm2031, %v2024, %v2028
        %v2033 = vand.u32 2147483647, %v1642
        %vm2034 = vcmp.eq.f32.partialorder %v2033, 8.507059e+37
        %v2035 = vand.u32 %v1642, 2147483648
        %v2036 = vor.u32 1.1754944e-38, %v2035
        %v2037 = vsel %vm2034, %v2036, %v2032
        %v2038 = vmul.f32 1.0, %v2037
        %v2039 = vrcp.pop %v1643
        %v2040 = vmul.f32 %v1643, %v2039
        %v2041 = vsub.f32 1.0, %v2040
        %v2042 = vmul.f32 %v2039, %v2041
        %v2043 = vadd.f32 %v2039, %v2042
        %vm2044 = vweird.f32 %v1643
        %vm2045 = vweird.f32 %v2039
        %vm2046 = vmor %vm2044, %vm2045
        %v2047 = vsel %vm2046, %v2039, %v2043
        %v2048 = vand.u32 2147483647, %v1643
        %vm2049 = vcmp.eq.f32.partialorder %v2048, 8.507059e+37
        %v2050 = vand.u32 %v1643, 2147483648
        %v2051 = vor.u32 1.1754944e-38, %v2050
        %v2052 = vsel %vm2049, %v2051, %v2047
        %v2053 = vmul.f32 1.0, %v2052
        %v2054 = vrcp.pop %v1644
        %v2055 = vmul.f32 %v1644, %v2054
        %v2056 = vsub.f32 1.0, %v2055
        %v2057 = vmul.f32 %v2054, %v2056
        %v2058 = vadd.f32 %v2054, %v2057
        %vm2059 = vweird.f32 %v1644
        %vm2060 = vweird.f32 %v2054
        %vm2061 = vmor %vm2059, %vm2060
        %v2062 = vsel %vm2061, %v2054, %v2058
        %v2063 = vand.u32 2147483647, %v1644
        %vm2064 = vcmp.eq.f32.partialorder %v2063, 8.507059e+37
        %v2065 = vand.u32 %v1644, 2147483648
        %v2066 = vor.u32 1.1754944e-38, %v2065
        %v2067 = vsel %vm2064, %v2066, %v2062
        %v2068 = vmul.f32 1.0, %v2067
        %v2069 = vrcp.pop %v1645
        %v2070 = vmul.f32 %v1645, %v2069
        %v2071 = vsub.f32 1.0, %v2070
        %v2072 = vmul.f32 %v2069, %v2071
        %v2073 = vadd.f32 %v2069, %v2072
        %vm2074 = vweird.f32 %v1645
        %vm2075 = vweird.f32 %v2069
        %vm2076 = vmor %vm2074, %vm2075
        %v2077 = vsel %vm2076, %v2069, %v2073
        %v2078 = vand.u32 2147483647, %v1645
        %vm2079 = vcmp.eq.f32.partialorder %v2078, 8.507059e+37
        %v2080 = vand.u32 %v1645, 2147483648
        %v2081 = vor.u32 1.1754944e-38, %v2080
        %v2082 = vsel %vm2079, %v2081, %v2077
        %v2083 = vmul.f32 1.0, %v2082
        %v2084 = vrcp.pop %v1646
        %v2085 = vmul.f32 %v1646, %v2084
        %v2086 = vsub.f32 1.0, %v2085
        %v2087 = vmul.f32 %v2084, %v2086
        %v2088 = vadd.f32 %v2084, %v2087
        %vm2089 = vweird.f32 %v1646
        %vm2090 = vweird.f32 %v2084
        %vm2091 = vmor %vm2089, %vm2090
        %v2092 = vsel %vm2091, %v2084, %v2088
        %v2093 = vand.u32 2147483647, %v1646
        %vm2094 = vcmp.eq.f32.partialorder %v2093, 8.507059e+37
        %v2095 = vand.u32 %v1646, 2147483648
        %v2096 = vor.u32 1.1754944e-38, %v2095
        %v2097 = vsel %vm2094, %v2096, %v2092
        %v2098 = vmul.f32 1.0, %v2097
        %v2099 = vrcp.pop %v1647
        %v2100 = vmul.f32 %v1647, %v2099
        %v2101 = vsub.f32 1.0, %v2100
        %v2102 = vmul.f32 %v2099, %v2101
        %v2103 = vadd.f32 %v2099, %v2102
        %vm2104 = vweird.f32 %v1647
        %vm2105 = vweird.f32 %v2099
        %vm2106 = vmor %vm2104, %vm2105
        %v2107 = vsel %vm2106, %v2099, %v2103
        %v2108 = vand.u32 2147483647, %v1647
        %vm2109 = vcmp.eq.f32.partialorder %v2108, 8.507059e+37
        %v2110 = vand.u32 %v1647, 2147483648
        %v2111 = vor.u32 1.1754944e-38, %v2110
        %v2112 = vsel %vm2109, %v2111, %v2107
        %v2113 = vmul.f32 1.0, %v2112
        %v2114 = vrcp.pop %v1648
        %v2115 = vmul.f32 %v1648, %v2114
        %v2116 = vsub.f32 1.0, %v2115
        %v2117 = vmul.f32 %v2114, %v2116
        %v2118 = vadd.f32 %v2114, %v2117
        %vm2119 = vweird.f32 %v1648
        %vm2120 = vweird.f32 %v2114
        %vm2121 = vmor %vm2119, %vm2120
        %v2122 = vsel %vm2121, %v2114, %v2118
        %v2123 = vand.u32 2147483647, %v1648
        %vm2124 = vcmp.eq.f32.partialorder %v2123, 8.507059e+37
        %v2125 = vand.u32 %v1648, 2147483648
        %v2126 = vor.u32 1.1754944e-38, %v2125
        %v2127 = vsel %vm2124, %v2126, %v2122
        %v2128 = vmul.f32 1.0, %v2127
        %v2129 = vld [vmem:[%s4] sm:$0x1]
        %2131 = vset.pattern.permute.xlu0 64
        %2132 = vperm.xlu0 %2131, %v2129
        %v2133 = vpop.permute.xlu0 %2132
        %v2135 = vperm.slane %v2133, 0
        %vm2136 = vcmask 523264
        %v2137 = vsel %vm2136, %v2129, 0
        %2139 = vmatpush.msra.mxu0 0.0
        %2140 = vmatpush.msra.mxu0 0.0
        %2141 = vmatpush.msra.mxu0 0.0
        %2142 = vmatpush.msra.mxu0 0.0
        %2143 = vmatpush.msra.mxu0 0.0
        %2144 = vmatpush.msra.mxu0 0.0
        %2145 = vmatpush.msra.mxu0 0.0
        %2146 = vmatpush.msra.mxu0 0.0
        %2147 = vmatpush.msra.mxu0 %v2083
        %2148 = vmatpush.msra.mxu0 %v2023
        %2149 = vmatpush.msra.mxu0 %v1963
        %2150 = vmatpush.msra.mxu0 %v1903
        %2151 = vmatpush.msra.mxu0 %v1843
        %2152 = vmatpush.msra.mxu0 %v1783
        %2153 = vmatpush.msra.mxu0 %v1723
        %2154 = vmatpush.msra.mxu0 %v1663
        %2155 = vmatmul.f32.gmra.mxu0 %v2137
        %v2156 = vpop.f32.mrf.mxu0
        %v2157 = vadd.f32 %v2135, %v2156
        %2158 = vdwg.mxu0
        %2159 = vmatpush.msra.mxu0 0.0
        %2160 = vmatpush.msra.mxu0 0.0
        %2161 = vmatpush.msra.mxu0 0.0
        %2162 = vmatpush.msra.mxu0 0.0
        %2163 = vmatpush.msra.mxu0 0.0
        %2164 = vmatpush.msra.mxu0 0.0
        %2165 = vmatpush.msra.mxu0 0.0
        %2166 = vmatpush.msra.mxu0 0.0
        %2167 = vmatpush.msra.mxu0 %v2098
        %2168 = vmatpush.msra.mxu0 %v2038
        %2169 = vmatpush.msra.mxu0 %v1978
        %2170 = vmatpush.msra.mxu0 %v1918
        %2171 = vmatpush.msra.mxu0 %v1858
        %2172 = vmatpush.msra.mxu0 %v1798
        %2173 = vmatpush.msra.mxu0 %v1738
        %2174 = vmatpush.msra.mxu0 %v1678
        %2175 = vmatmul.f32.gmra.mxu0 %v2137
        %v2176 = vpop.f32.mrf.mxu0
        %v2177 = vadd.f32 %v2135, %v2176
        %2178 = vdwg.mxu0
        %2179 = vmatpush.msra.mxu0 0.0
        %2180 = vmatpush.msra.mxu0 0.0
        %2181 = vmatpush.msra.mxu0 0.0
        %2182 = vmatpush.msra.mxu0 0.0
        %2183 = vmatpush.msra.mxu0 0.0
        %2184 = vmatpush.msra.mxu0 0.0
        %2185 = vmatpush.msra.mxu0 0.0
        %2186 = vmatpush.msra.mxu0 0.0
        %2187 = vmatpush.msra.mxu0 %v2113
        %2188 = vmatpush.msra.mxu0 %v2053
        %2189 = vmatpush.msra.mxu0 %v1993
        %2190 = vmatpush.msra.mxu0 %v1933
        %2191 = vmatpush.msra.mxu0 %v1873
        %2192 = vmatpush.msra.mxu0 %v1813
        %2193 = vmatpush.msra.mxu0 %v1753
        %2194 = vmatpush.msra.mxu0 %v1693
        %2195 = vmatmul.f32.gmra.mxu0 %v2137
        %v2196 = vpop.f32.mrf.mxu0
        %v2197 = vadd.f32 %v2135, %v2196
        %2198 = vdwg.mxu0
        %2199 = vmatpush.msra.mxu0 0.0
        %2200 = vmatpush.msra.mxu0 0.0
        %2201 = vmatpush.msra.mxu0 0.0
        %2202 = vmatpush.msra.mxu0 0.0
        %2203 = vmatpush.msra.mxu0 0.0
        %2204 = vmatpush.msra.mxu0 0.0
        %2205 = vmatpush.msra.mxu0 0.0
        %2206 = vmatpush.msra.mxu0 0.0
        %2207 = vmatpush.msra.mxu0 %v2128
        %2208 = vmatpush.msra.mxu0 %v2068
        %2209 = vmatpush.msra.mxu0 %v2008
        %2210 = vmatpush.msra.mxu0 %v1948
        %2211 = vmatpush.msra.mxu0 %v1888
        %2212 = vmatpush.msra.mxu0 %v1828
        %2213 = vmatpush.msra.mxu0 %v1768
        %2214 = vmatpush.msra.mxu0 %v1708
        %2215 = vmatmul.f32.gmra.mxu0 %v2137
        %v2216 = vpop.f32.mrf.mxu0
        %v2217 = vadd.f32 %v2135, %v2216
        %2218 = vdwg.mxu0
        %v2223 = vrot.slane %v2177, 7
        %v2224 = vrot.slane %v2197, 6
        %v2225 = vrot.slane %v2217, 5
        %vm2226 = vcmask 1040384
        %v2227 = vsel %vm2226, %v2157, %v2223
        %vm2228 = vcmask 1042434
        %v2229 = vsel %vm2228, %v2224, %v2225
        %vm2230 = vcmask 1041408
        %v2231 = vsel %vm2230, %v2227, %v2229
        %v2233 = vlaneseq
        %vm2234 = vcmp.ge.s32.totalorder %v2233, 0
        %vm2235 = vcmp.lt.s32.totalorder %v2233, 512
        %vm2236 = vmand %vm2234, %vm2235
        %2237 = vst.msk [vmem:[%s218] sm:$0xf] %vm2236, %v2231
        %s2238 = sand.u32 %s137, 1
        %s2239 = scalar_lea.sflag [#allocation3], %s2238
        %s2240 = sand.u32 %s137, 1
        %s2241 = smul.addr %s2240, 4
        %s2242 = scalar_lea.vmem [#allocation2], %s2241
        // Predicated region
        $region41: #{tpu_custom_call.1} parent=39 // pred_check
          %p2243 = pneg %p147
        $region42: #{tpu_custom_call.1} parent=39 // pred_check_branch
          %2245 = sbr.rel (%p2243) target = $region44
        $region43: #{tpu_custom_call.1} parent=39 // pred_region
          %s2246 = smul.u32 4, %s19
          %2248 = vsyncadd %s2239, 0
          %s2249 = scalar_lea.hbm %s5, %s2246
          %s2251 = sshll.u32 %s2242, 4
          %s2252 = int_to_ptr.vmem [resolvable:$true] %s2251
          %s2253 = sshll.u32 %s2249, 4
          %s2254 = int_to_ptr.hbm [resolvable:$true] %s2253
          %2256 = dma.vmem_to_hbm [thread:$0]  %s2252, 64, %s2254, %s2239
        $region44: #{tpu_custom_call.1} parent=39 // pred_fallthru
          _
      $region40: #{tpu_custom_call.1} parent=5 // pred_fallthru
        _
      %p2257 = scmp.le.s32.totalorder 2, %s14
      // Predicated region
      $region45: #{tpu_custom_call.1} parent=5 // pred_check
        %p2258 = pneg %p2257
      $region46: #{tpu_custom_call.1} parent=5 // pred_check_branch
        %2260 = sbr.rel (%p2258) target = $region48
      $region47: #{tpu_custom_call.1} parent=5 // pred_region
        %s2261 = ssub.s32 %s14, 2
        // Predicated region
        $region49: #{tpu_custom_call.1} parent=47 // pred_check
          %p2262 = pneg %p153
        $region50: #{tpu_custom_call.1} parent=47 // pred_check_branch
          %2264 = sbr.rel (%p2262) target = $region52
        $region51: #{tpu_custom_call.1} parent=47 // pred_region
          %s2265 = sand.u32 %s138, 1
          %s2266 = scalar_lea.sflag [#allocation3], %s2265
          %s2267 = sand.u32 %s138, 1
          %s2268 = smul.addr %s2267, 4
          %s2269 = scalar_lea.vmem [#allocation2], %s2268
          %2271 = dma.done %s2266, 64
        $region52: #{tpu_custom_call.1} parent=47 // pred_fallthru
          _
      $region48: #{tpu_custom_call.1} parent=5 // pred_fallthru
        _
    $region6: #{tpu_custom_call.1} parent=1 // loop_footer
      %s18 = sadd.s32 1, %s14
    $region7: #{tpu_custom_call.1} parent=1 // loop_footer_branch
      %13 = sbr.rel target = $region3
    $region8: #{tpu_custom_call.1} parent=1 // loop_exit
      _
    %2272 = vsyncpa [#allocation3], 1
    %s2273 = scalar_lea.sflag [#allocation3], 1
    %2274 = vsyncpa %s2273, 1

</llo_original>
